<compile_context>
chip_gen: v5e
topology: v5e:2x2
jax: 0.10.0
libtpu: 0.0.40
codegen_flags: <defaults>
</compile_context>

<pallas_src>
import jax
import jax.numpy as jnp
from jax.experimental import pallas as pl
from jax.experimental.pallas import tpu as pltpu


def _round_up(n, m):
    return ((n + m - 1) // m) * m


def ffn_kernel(x_ref, w1_ref, b1_ref, w2_ref, b2_ref, w3_ref, b3_ref, o_ref):
    # x arrives f32 straight from HBM; cast to bf16 right before the MXU.
    x = x_ref[...].astype(jnp.bfloat16)
    # hidden1: bf16 operands on the MXU, f32 accumulation, f32 bias + ReLU.
    h1 = jnp.dot(x, w1_ref[...], preferred_element_type=jnp.float32)
    h1 = jnp.maximum(h1 + b1_ref[...], 0.0)
    # hidden2 (re-cast activation to bf16 for the MXU, accumulate in f32).
    h2 = jnp.dot(h1.astype(jnp.bfloat16), w2_ref[...],
                 preferred_element_type=jnp.float32)
    h2 = jnp.maximum(h2 + b2_ref[...], 0.0)
    # output layer + sigmoid, all in f32.
    y = jnp.dot(h2.astype(jnp.bfloat16), w3_ref[...],
                preferred_element_type=jnp.float32)
    y = jax.nn.sigmoid(y + b3_ref[...])
    o_ref[...] = y.astype(o_ref.dtype)


def ffn_2hlayers(x, w1, b1, w2, b2, w3, b3, *, tb=4096):
    """x: [B, F] f32; weights [in, out]; biases [1, out]. Returns [B, 3] f32."""
    B, F = x.shape
    h1_dim = w1.shape[1]
    h2_dim = w2.shape[1]
    n_out = w3.shape[1]

    # x stays f32 (single HBM read, in-kernel cast). Weights -> bf16 once
    # (tiny, VMEM-resident). Biases f32 for the f32 epilogue.
    x = x.astype(jnp.float32)
    w1_bf = w1.astype(jnp.bfloat16)
    w2_bf = w2.astype(jnp.bfloat16)
    w3_bf = w3.astype(jnp.bfloat16)
    b1 = b1.astype(jnp.float32)
    b2 = b2.astype(jnp.float32)
    b3 = b3.astype(jnp.float32)

    # Batch tile: large to amortize per-step overhead, clamped for tiny B,
    # always a multiple of 8 (sublane). Ragged last tile handled by Pallas.
    tb = max(8, _round_up(min(tb, _round_up(B, 8)), 8))
    grid = (pl.cdiv(B, tb),)

    flops = 2 * B * (F * h1_dim + h1_dim * h2_dim + h2_dim * n_out)
    bytes_accessed = (
        B * F * 4 + B * n_out * 4
        + 2 * (F * h1_dim + h1_dim * h2_dim + h2_dim * n_out)
        + 4 * (h1_dim + h2_dim + n_out)
    )
    cost = pl.CostEstimate(
        flops=flops, transcendentals=B * n_out, bytes_accessed=bytes_accessed)

    out = pl.pallas_call(
        ffn_kernel,
        out_shape=jax.ShapeDtypeStruct((B, n_out), jnp.float32),
        grid=grid,
        in_specs=[
            # x: tiled over batch (pipelined / double-buffered), f32 from HBM.
            pl.BlockSpec((tb, F), lambda i: (i, 0)),
            # Weights & biases: full-array blocks, constant index_map ->
            # VMEM-resident, never re-DMA'd per grid step.
            pl.BlockSpec(w1_bf.shape, lambda i: (0, 0)),
            pl.BlockSpec(b1.shape, lambda i: (0, 0)),
            pl.BlockSpec(w2_bf.shape, lambda i: (0, 0)),
            pl.BlockSpec(b2.shape, lambda i: (0, 0)),
            pl.BlockSpec(w3_bf.shape, lambda i: (0, 0)),
            pl.BlockSpec(b3.shape, lambda i: (0, 0)),
        ],
        out_specs=pl.BlockSpec((tb, n_out), lambda i: (i, 0)),
        compiler_params=pltpu.CompilerParams(
            # Independent batch tiles -> shard across both v7x TensorCores
            # (no-op on single-TC v5e/v6e).
            dimension_semantics=("parallel",),
        ),
        cost_estimate=cost,
    )(x, w1_bf, b1, w2_bf, b2, w3_bf, b3)
    return out


def init_linear(key, fan_in, fan_out):
    """Deterministic init matching PyTorch nn.Linear default (U[-1/sqrt(fan_in), +])."""
    kw, kb = jax.random.split(key)
    bound = 1.0 / jnp.sqrt(jnp.float32(fan_in))
    # Stored as [in, out] (transposed vs. PyTorch's [out, in]).
    w = jax.random.uniform(kw, (fan_in, fan_out), jnp.float32, -bound, bound)
    b = jax.random.uniform(kb, (1, fan_out), jnp.float32, -bound, bound)
    return w, b


def reference_ffn(x, w1, b1, w2, b2, w3, b3):
    """Pure-JAX reference mirroring the kernel's bf16-matmul / f32-accum numerics.

    Note: this intentionally mirrors the kernel's bf16 MXU inputs, so it does
    not validate parity with PyTorch's pure-f32 path (expected ~1e-3 delta).
    """
    x_bf = x.astype(jnp.bfloat16)
    w1_bf, w2_bf, w3_bf = (w.astype(jnp.bfloat16) for w in (w1, w2, w3))
    h1 = jnp.maximum(
        jnp.dot(x_bf, w1_bf, preferred_element_type=jnp.float32) + b1, 0.0)
    h2 = jnp.maximum(
        jnp.dot(h1.astype(jnp.bfloat16), w2_bf,
                preferred_element_type=jnp.float32) + b2, 0.0)
    y = jax.nn.sigmoid(
        jnp.dot(h2.astype(jnp.bfloat16), w3_bf,
                preferred_element_type=jnp.float32) + b3)
    return y


if __name__ == "__main__":
    # Shapes consistent with FFN_2HLayers(n_features, n_hl1, n_hl2).
    n_features, n_hl1, n_hl2, n_out = 16, 32, 32, 3
    batch = 1000  # not a multiple of tb -> exercises the ragged-last-tile path

    key = jax.random.PRNGKey(0)
    kx, k1, k2, k3 = jax.random.split(key, 4)

    x = jax.random.normal(kx, (batch, n_features), jnp.float32)
    w1, b1 = init_linear(k1, n_features, n_hl1)
    w2, b2 = init_linear(k2, n_hl1, n_hl2)
    w3, b3 = init_linear(k3, n_hl2, n_out)

    # Small tb so the test exercises a multi-step pipeline AND a ragged tail
    # (grid = cdiv(1000, 384) = 3, last tile covers 232 valid rows).
    y = ffn_2hlayers(x, w1, b1, w2, b2, w3, b3, tb=384)
    y = jax.block_until_ready(y)

    y_ref = reference_ffn(x, w1, b1, w2, b2, w3, b3)
    assert y.shape == (batch, n_out)
    assert jnp.allclose(y, y_ref, atol=1e-4, rtol=1e-4), "mismatch vs reference"

    print("KERNEL_OK")
</pallas_src>

<mosaic_0001>
module attributes {stable_mosaic.version = 11 : i64} {
  func.func @ffn_kernel(%arg0: i32, %arg1: memref<384x16xf32, #tpu.memory_space<vmem>>, %arg2: memref<16x32xbf16, #tpu.memory_space<vmem>>, %arg3: memref<1x32xf32, #tpu.memory_space<vmem>>, %arg4: memref<32x32xbf16, #tpu.memory_space<vmem>>, %arg5: memref<1x32xf32, #tpu.memory_space<vmem>>, %arg6: memref<32x3xbf16, #tpu.memory_space<vmem>>, %arg7: memref<1x3xf32, #tpu.memory_space<vmem>>, %arg8: memref<384x3xf32, #tpu.memory_space<vmem>>) attributes {dimension_semantics = [#tpu.dimension_semantics<parallel>], iteration_bounds = array<i64: 3>, scalar_prefetch = 0 : i64, scratch_operands = 0 : i64, tpu.core_type = #tpu.core_type<tc>, window_params = [{transform_indices = @transform_0, window_bounds = array<i64: 384, 16>}, {pipeline_mode = #tpu.pipeline_mode<synchronous>, transform_indices = @transform_1, window_bounds = array<i64: 16, 32>}, {pipeline_mode = #tpu.pipeline_mode<synchronous>, transform_indices = @transform_2, window_bounds = array<i64: 1, 32>}, {pipeline_mode = #tpu.pipeline_mode<synchronous>, transform_indices = @transform_3, window_bounds = array<i64: 32, 32>}, {pipeline_mode = #tpu.pipeline_mode<synchronous>, transform_indices = @transform_4, window_bounds = array<i64: 1, 32>}, {pipeline_mode = #tpu.pipeline_mode<synchronous>, transform_indices = @transform_5, window_bounds = array<i64: 32, 3>}, {pipeline_mode = #tpu.pipeline_mode<synchronous>, transform_indices = @transform_6, window_bounds = array<i64: 1, 3>}, {transform_indices = @transform_7, window_bounds = array<i64: 384, 3>}]} {
    %c0 = arith.constant 0 : index
    %c0_0 = arith.constant 0 : index
    %0 = vector.load %arg1[%c0, %c0_0] : memref<384x16xf32, #tpu.memory_space<vmem>>, vector<384x16xf32>
    %1 = arith.truncf %0 : vector<384x16xf32> to vector<384x16xbf16>
    %c0_1 = arith.constant 0 : index
    %c0_2 = arith.constant 0 : index
    %2 = vector.load %arg2[%c0_1, %c0_2] : memref<16x32xbf16, #tpu.memory_space<vmem>>, vector<16x32xbf16>
    %cst = arith.constant dense<0.000000e+00> : vector<384x32xf32>
    %3 = tpu.matmul %1, %2, %cst {dimension_numbers = #tpu.dot_dimension_numbers<[1], [0], [0], [1], [0, 0, 1, 1], [], []>} : vector<384x16xbf16>, vector<16x32xbf16>, vector<384x32xf32> -> vector<384x32xf32>
    %c0_3 = arith.constant 0 : index
    %c0_4 = arith.constant 0 : index
    %4 = vector.load %arg3[%c0_3, %c0_4] : memref<1x32xf32, #tpu.memory_space<vmem>>, vector<1x32xf32>
    %5 = vector.broadcast %4 : vector<1x32xf32> to vector<384x32xf32>
    %6 = arith.addf %3, %5 : vector<384x32xf32>
    %cst_5 = arith.constant 0.000000e+00 : f32
    %7 = vector.broadcast %cst_5 : f32 to vector<384x32xf32>
    %8 = arith.maximumf %6, %7 : vector<384x32xf32>
    %9 = arith.truncf %8 : vector<384x32xf32> to vector<384x32xbf16>
    %c0_6 = arith.constant 0 : index
    %c0_7 = arith.constant 0 : index
    %10 = vector.load %arg4[%c0_6, %c0_7] : memref<32x32xbf16, #tpu.memory_space<vmem>>, vector<32x32xbf16>
    %cst_8 = arith.constant dense<0.000000e+00> : vector<384x32xf32>
    %11 = tpu.matmul %9, %10, %cst_8 {dimension_numbers = #tpu.dot_dimension_numbers<[1], [0], [0], [1], [0, 0, 1, 1], [], []>} : vector<384x32xbf16>, vector<32x32xbf16>, vector<384x32xf32> -> vector<384x32xf32>
    %c0_9 = arith.constant 0 : index
    %c0_10 = arith.constant 0 : index
    %12 = vector.load %arg5[%c0_9, %c0_10] : memref<1x32xf32, #tpu.memory_space<vmem>>, vector<1x32xf32>
    %13 = vector.broadcast %12 : vector<1x32xf32> to vector<384x32xf32>
    %14 = arith.addf %11, %13 : vector<384x32xf32>
    %cst_11 = arith.constant 0.000000e+00 : f32
    %15 = vector.broadcast %cst_11 : f32 to vector<384x32xf32>
    %16 = arith.maximumf %14, %15 : vector<384x32xf32>
    %17 = arith.truncf %16 : vector<384x32xf32> to vector<384x32xbf16>
    %c0_12 = arith.constant 0 : index
    %c0_13 = arith.constant 0 : index
    %18 = vector.load %arg6[%c0_12, %c0_13] : memref<32x3xbf16, #tpu.memory_space<vmem>>, vector<32x3xbf16>
    %cst_14 = arith.constant dense<0.000000e+00> : vector<384x3xf32>
    %19 = tpu.matmul %17, %18, %cst_14 {dimension_numbers = #tpu.dot_dimension_numbers<[1], [0], [0], [1], [0, 0, 1, 1], [], []>} : vector<384x32xbf16>, vector<32x3xbf16>, vector<384x3xf32> -> vector<384x3xf32>
    %c0_15 = arith.constant 0 : index
    %c0_16 = arith.constant 0 : index
    %20 = vector.load %arg7[%c0_15, %c0_16] : memref<1x3xf32, #tpu.memory_space<vmem>>, vector<1x3xf32>
    %21 = vector.broadcast %20 : vector<1x3xf32> to vector<384x3xf32>
    %22 = arith.addf %19, %21 : vector<384x3xf32>
    %23 = arith.negf %22 : vector<384x3xf32>
    %24 = math.exp %23 : vector<384x3xf32>
    %cst_17 = arith.constant 1.000000e+00 : f32
    %25 = vector.broadcast %cst_17 : f32 to vector<384x3xf32>
    %26 = arith.addf %25, %24 : vector<384x3xf32>
    %27 = arith.divf %25, %26 : vector<384x3xf32>
    %c0_18 = arith.constant 0 : index
    %c0_19 = arith.constant 0 : index
    %28 = vector.load %arg8[%c0_18, %c0_19] : memref<384x3xf32, #tpu.memory_space<vmem>>, vector<384x3xf32>
    tpu.vector_store %arg8[%c0_18, %c0_19], %27 {strides = array<i32>} : memref<384x3xf32, #tpu.memory_space<vmem>>, vector<384x3xf32>,
    return
  }
  func.func @transform_0(%arg0: i32) -> (i32, i32) {
    %c0_i32 = arith.constant 0 : i32
    %c0_i32_0 = arith.constant 0 : i32
    return %arg0, %c0_i32 : i32, i32
  }
  func.func @transform_1(%arg0: i32) -> (i32, i32) {
    %c0_i32 = arith.constant 0 : i32
    %c0_i32_0 = arith.constant 0 : i32
    %c0_i32_1 = arith.constant 0 : i32
    return %c0_i32, %c0_i32_0 : i32, i32
  }
  func.func @transform_2(%arg0: i32) -> (i32, i32) {
    %c0_i32 = arith.constant 0 : i32
    %c0_i32_0 = arith.constant 0 : i32
    %c0_i32_1 = arith.constant 0 : i32
    return %c0_i32, %c0_i32_0 : i32, i32
  }
  func.func @transform_3(%arg0: i32) -> (i32, i32) {
    %c0_i32 = arith.constant 0 : i32
    %c0_i32_0 = arith.constant 0 : i32
    %c0_i32_1 = arith.constant 0 : i32
    return %c0_i32, %c0_i32_0 : i32, i32
  }
  func.func @transform_4(%arg0: i32) -> (i32, i32) {
    %c0_i32 = arith.constant 0 : i32
    %c0_i32_0 = arith.constant 0 : i32
    %c0_i32_1 = arith.constant 0 : i32
    return %c0_i32, %c0_i32_0 : i32, i32
  }
  func.func @transform_5(%arg0: i32) -> (i32, i32) {
    %c0_i32 = arith.constant 0 : i32
    %c0_i32_0 = arith.constant 0 : i32
    %c0_i32_1 = arith.constant 0 : i32
    return %c0_i32, %c0_i32_0 : i32, i32
  }
  func.func @transform_6(%arg0: i32) -> (i32, i32) {
    %c0_i32 = arith.constant 0 : i32
    %c0_i32_0 = arith.constant 0 : i32
    %c0_i32_1 = arith.constant 0 : i32
    return %c0_i32, %c0_i32_0 : i32, i32
  }
  func.func @transform_7(%arg0: i32) -> (i32, i32) {
    %c0_i32 = arith.constant 0 : i32
    %c0_i32_0 = arith.constant 0 : i32
    return %arg0, %c0_i32 : i32, i32
  }
}

</mosaic_0001>

<llo_original>
// kernel: tpu_custom_call.1
$region0: #{tpu_custom_call.1}
  #allocation0 [shape = 'u32[]', space=smem, size = 0x4, offset = 0x4, fixed_abs, tag = 'smem constant byte address 0x4 - core index']
  #allocation1 [shape = 'u32[72,128]{1,0:T(1,128)}', space=vmem, size = 0x9000, scoped, tag = 'internal scratch']
  %s0 = inlined_call_operand.vmem [shape: f32[1000,16], index: 0, kind: input, shape index: {}]
  %s1 = inlined_call_operand.vmem [shape: bf16[16,32], index: 1, kind: input, shape index: {}]
  %s2 = inlined_call_operand.vmem [shape: f32[1,32], index: 2, kind: input, shape index: {}]
  %s3 = inlined_call_operand.vmem [shape: bf16[32,32], index: 3, kind: input, shape index: {}]
  %s4 = inlined_call_operand.vmem [shape: f32[1,32], index: 4, kind: input, shape index: {}]
  %s5 = inlined_call_operand.vmem [shape: bf16[32,3], index: 5, kind: input, shape index: {}]
  %s6 = inlined_call_operand.vmem [shape: f32[1,3], index: 6, kind: input, shape index: {}]
  %s7 = inlined_call_operand.vmem [shape: f32[1000,3], index: 7, kind: output, shape index: {}]
  %s8 = sld [smem:[#allocation0]]
  $region109: #{tpu_custom_call.1} parent=0
    _
  %s10 = ssub.s32 1, %s8
  %s11 = scalar_select 0, %s10, %s8
  $region1: #{tpu_custom_call.1} parent=0
    #allocation2 [shape = 'u8[393216]{0}', space=vmem, size = 0x60000, scoped, tag = 'output window, operand 0']
    loop: start=0, step=1, limit=5
    $region2: #{tpu_custom_call.1} parent=1 // loop_pre_header
      _
    $region3: #{tpu_custom_call.1} parent=1 // loop_header
      %s13 = sphi 0, %s17
      %p14 = scmp.ge.s32.totalorder %s13, 5
      %s23 = sphi 0, %s25
      %s26 = sphi 0, %s23
      %s27 = sphi 0, %s26
      %s43 = sphi 0, %s27
      %s47 = sphi 0, %s47
      %s49 = sphi 0, %s47
      %s50 = sphi 0, %s49
      %s64 = sphi 0, %s50
      %s68 = sphi 0, %s68
      %s70 = sphi 0, %s68
      %s71 = sphi 0, %s70
      %s85 = sphi 0, %s71
      %s89 = sphi 0, %s89
      %s91 = sphi 0, %s89
      %s92 = sphi 0, %s91
      %s106 = sphi 0, %s92
      %s110 = sphi 0, %s110
      %s112 = sphi 0, %s110
      %s113 = sphi 0, %s112
      %s127 = sphi 0, %s113
      %s131 = sphi 0, %s131
      %s133 = sphi 0, %s131
      %s134 = sphi 0, %s133
      %s148 = sphi 0, %s134
      %s152 = sphi 0, %s152
      %s154 = sphi 0, %s152
      %s155 = sphi 0, %s154
      %s169 = sphi 0, %s155
      %s175 = sphi 0, %s177
      %s178 = sphi 0, %s175
      %s179 = sphi 0, %s178
      %s195 = sphi 0, %s179
    $region4: #{tpu_custom_call.1} parent=1 // loop_header_branch
      %16 = sbr.rel (%p14) target = $region8
    $region5: #{tpu_custom_call.1} parent=1 // loop_body
      %s18 = ssub.s32 %s13, 1
      %s19 = ssub.s32 %s13, 2
      %s20 = sadd.s32 %s13, 1
      %s21 = ssub.s32 %s13, %s20
      %p22 = scmp.eq.s32.totalorder %s21, 0
      %s24 = sadd.s32 %s23, 1
      %s25 = scalar_select %p22, %s23, %s24
      %p28 = pneg %p22
      %p29 = scmp.eq.s32.totalorder %s13, 2
      %p30 = por %p28, %p29
      %p31 = scmp.ne.s32.totalorder %s23, %s26
      %p32 = scmp.eq.s32.totalorder %s13, 0
      %p33 = por %p31, %p32
      %p34 = scmp.ne.s32.totalorder %s23, %s26
      %p35 = scmp.eq.s32.totalorder %s18, 2
      %p36 = por %p34, %p35
      %p37 = scmp.ne.s32.totalorder %s26, %s27
      %p38 = scmp.eq.s32.totalorder %s18, 0
      %p39 = por %p37, %p38
      %p40 = scmp.ne.s32.totalorder %s26, %s27
      %p41 = scmp.eq.s32.totalorder %s19, 2
      %p42 = por %p40, %p41
      %p44 = scmp.ne.s32.totalorder %s27, %s43
      %p45 = scmp.eq.s32.totalorder %s19, 0
      %p46 = por %p44, %p45
      %s48 = sadd.s32 %s47, 1
      %p51 = scmp.eq.s32.totalorder %s13, 2
      %p52 = scmp.ne.s32.totalorder %s47, %s49
      %p53 = scmp.eq.s32.totalorder %s13, 0
      %p54 = por %p52, %p53
      %p55 = scmp.ne.s32.totalorder %s47, %s49
      %p56 = scmp.eq.s32.totalorder %s18, 2
      %p57 = por %p55, %p56
      %p58 = scmp.ne.s32.totalorder %s49, %s50
      %p59 = scmp.eq.s32.totalorder %s18, 0
      %p60 = por %p58, %p59
      %p61 = scmp.ne.s32.totalorder %s49, %s50
      %p62 = scmp.eq.s32.totalorder %s19, 2
      %p63 = por %p61, %p62
      %p65 = scmp.ne.s32.totalorder %s50, %s64
      %p66 = scmp.eq.s32.totalorder %s19, 0
      %p67 = por %p65, %p66
      %s69 = sadd.s32 %s68, 1
      %p72 = scmp.eq.s32.totalorder %s13, 2
      %p73 = scmp.ne.s32.totalorder %s68, %s70
      %p74 = scmp.eq.s32.totalorder %s13, 0
      %p75 = por %p73, %p74
      %p76 = scmp.ne.s32.totalorder %s68, %s70
      %p77 = scmp.eq.s32.totalorder %s18, 2
      %p78 = por %p76, %p77
      %p79 = scmp.ne.s32.totalorder %s70, %s71
      %p80 = scmp.eq.s32.totalorder %s18, 0
      %p81 = por %p79, %p80
      %p82 = scmp.ne.s32.totalorder %s70, %s71
      %p83 = scmp.eq.s32.totalorder %s19, 2
      %p84 = por %p82, %p83
      %p86 = scmp.ne.s32.totalorder %s71, %s85
      %p87 = scmp.eq.s32.totalorder %s19, 0
      %p88 = por %p86, %p87
      %s90 = sadd.s32 %s89, 1
      %p93 = scmp.eq.s32.totalorder %s13, 2
      %p94 = scmp.ne.s32.totalorder %s89, %s91
      %p95 = scmp.eq.s32.totalorder %s13, 0
      %p96 = por %p94, %p95
      %p97 = scmp.ne.s32.totalorder %s89, %s91
      %p98 = scmp.eq.s32.totalorder %s18, 2
      %p99 = por %p97, %p98
      %p100 = scmp.ne.s32.totalorder %s91, %s92
      %p101 = scmp.eq.s32.totalorder %s18, 0
      %p102 = por %p100, %p101
      %p103 = scmp.ne.s32.totalorder %s91, %s92
      %p104 = scmp.eq.s32.totalorder %s19, 2
      %p105 = por %p103, %p104
      %p107 = scmp.ne.s32.totalorder %s92, %s106
      %p108 = scmp.eq.s32.totalorder %s19, 0
      %p109 = por %p107, %p108
      %s111 = sadd.s32 %s110, 1
      %p114 = scmp.eq.s32.totalorder %s13, 2
      %p115 = scmp.ne.s32.totalorder %s110, %s112
      %p116 = scmp.eq.s32.totalorder %s13, 0
      %p117 = por %p115, %p116
      %p118 = scmp.ne.s32.totalorder %s110, %s112
      %p119 = scmp.eq.s32.totalorder %s18, 2
      %p120 = por %p118, %p119
      %p121 = scmp.ne.s32.totalorder %s112, %s113
      %p122 = scmp.eq.s32.totalorder %s18, 0
      %p123 = por %p121, %p122
      %p124 = scmp.ne.s32.totalorder %s112, %s113
      %p125 = scmp.eq.s32.totalorder %s19, 2
      %p126 = por %p124, %p125
      %p128 = scmp.ne.s32.totalorder %s113, %s127
      %p129 = scmp.eq.s32.totalorder %s19, 0
      %p130 = por %p128, %p129
      %s132 = sadd.s32 %s131, 1
      %p135 = scmp.eq.s32.totalorder %s13, 2
      %p136 = scmp.ne.s32.totalorder %s131, %s133
      %p137 = scmp.eq.s32.totalorder %s13, 0
      %p138 = por %p136, %p137
      %p139 = scmp.ne.s32.totalorder %s131, %s133
      %p140 = scmp.eq.s32.totalorder %s18, 2
      %p141 = por %p139, %p140
      %p142 = scmp.ne.s32.totalorder %s133, %s134
      %p143 = scmp.eq.s32.totalorder %s18, 0
      %p144 = por %p142, %p143
      %p145 = scmp.ne.s32.totalorder %s133, %s134
      %p146 = scmp.eq.s32.totalorder %s19, 2
      %p147 = por %p145, %p146
      %p149 = scmp.ne.s32.totalorder %s134, %s148
      %p150 = scmp.eq.s32.totalorder %s19, 0
      %p151 = por %p149, %p150
      %s153 = sadd.s32 %s152, 1
      %p156 = scmp.eq.s32.totalorder %s13, 2
      %p157 = scmp.ne.s32.totalorder %s152, %s154
      %p158 = scmp.eq.s32.totalorder %s13, 0
      %p159 = por %p157, %p158
      %p160 = scmp.ne.s32.totalorder %s152, %s154
      %p161 = scmp.eq.s32.totalorder %s18, 2
      %p162 = por %p160, %p161
      %p163 = scmp.ne.s32.totalorder %s154, %s155
      %p164 = scmp.eq.s32.totalorder %s18, 0
      %p165 = por %p163, %p164
      %p166 = scmp.ne.s32.totalorder %s154, %s155
      %p167 = scmp.eq.s32.totalorder %s19, 2
      %p168 = por %p166, %p167
      %p170 = scmp.ne.s32.totalorder %s155, %s169
      %p171 = scmp.eq.s32.totalorder %s19, 0
      %p172 = por %p170, %p171
      %s173 = ssub.s32 %s13, %s20
      %p174 = scmp.eq.s32.totalorder %s173, 0
      %s176 = sadd.s32 %s175, 1
      %s177 = scalar_select %p174, %s175, %s176
      %p180 = pneg %p174
      %p181 = scmp.eq.s32.totalorder %s13, 2
      %p182 = por %p180, %p181
      %p183 = scmp.ne.s32.totalorder %s175, %s178
      %p184 = scmp.eq.s32.totalorder %s13, 0
      %p185 = por %p183, %p184
      %p186 = scmp.ne.s32.totalorder %s175, %s178
      %p187 = scmp.eq.s32.totalorder %s18, 2
      %p188 = por %p186, %p187
      %p189 = scmp.ne.s32.totalorder %s178, %s179
      %p190 = scmp.eq.s32.totalorder %s18, 0
      %p191 = por %p189, %p190
      %p192 = scmp.ne.s32.totalorder %s178, %s179
      %p193 = scmp.eq.s32.totalorder %s19, 2
      %p194 = por %p192, %p193
      %p196 = scmp.ne.s32.totalorder %s179, %s195
      %p197 = scmp.eq.s32.totalorder %s19, 0
      %p198 = por %p196, %p197
      %p199 = scmp.le.s32.totalorder 1, %s13
      %p200 = scmp.lt.s32.totalorder %s13, 4
      %p201 = pnand %p199, %p200
      %p202 = pneg %p201
      // Predicated region
      $region9: #{tpu_custom_call.1} parent=5 // pred_check
        _
      $region10: #{tpu_custom_call.1} parent=5 // pred_check_branch
        %204 = sbr.rel (%p201) target = $region12
      $region11: #{tpu_custom_call.1} parent=5 // pred_region
        %s205 = ssub.s32 %s13, 1
        // Predicated region
        $region13: #{tpu_custom_call.1} parent=11 // pred_check
          %p206 = pneg %p60
        $region14: #{tpu_custom_call.1} parent=11 // pred_check_branch
          %208 = sbr.rel (%p206) target = $region16
        $region15: #{tpu_custom_call.1} parent=11 // pred_region
          _
        $region16: #{tpu_custom_call.1} parent=11 // pred_fallthru
          _
        // Predicated region
        $region17: #{tpu_custom_call.1} parent=11 // pred_check
          %p209 = pneg %p81
        $region18: #{tpu_custom_call.1} parent=11 // pred_check_branch
          %211 = sbr.rel (%p209) target = $region20
        $region19: #{tpu_custom_call.1} parent=11 // pred_region
          _
        $region20: #{tpu_custom_call.1} parent=11 // pred_fallthru
          _
        // Predicated region
        $region21: #{tpu_custom_call.1} parent=11 // pred_check
          %p212 = pneg %p102
        $region22: #{tpu_custom_call.1} parent=11 // pred_check_branch
          %214 = sbr.rel (%p212) target = $region24
        $region23: #{tpu_custom_call.1} parent=11 // pred_region
          _
        $region24: #{tpu_custom_call.1} parent=11 // pred_fallthru
          _
        // Predicated region
        $region25: #{tpu_custom_call.1} parent=11 // pred_check
          %p215 = pneg %p123
        $region26: #{tpu_custom_call.1} parent=11 // pred_check_branch
          %217 = sbr.rel (%p215) target = $region28
        $region27: #{tpu_custom_call.1} parent=11 // pred_region
          _
        $region28: #{tpu_custom_call.1} parent=11 // pred_fallthru
          _
        // Predicated region
        $region29: #{tpu_custom_call.1} parent=11 // pred_check
          %p218 = pneg %p144
        $region30: #{tpu_custom_call.1} parent=11 // pred_check_branch
          %220 = sbr.rel (%p218) target = $region32
        $region31: #{tpu_custom_call.1} parent=11 // pred_region
          _
        $region32: #{tpu_custom_call.1} parent=11 // pred_fallthru
          _
        // Predicated region
        $region33: #{tpu_custom_call.1} parent=11 // pred_check
          %p221 = pneg %p165
        $region34: #{tpu_custom_call.1} parent=11 // pred_check_branch
          %223 = sbr.rel (%p221) target = $region36
        $region35: #{tpu_custom_call.1} parent=11 // pred_region
          _
        $region36: #{tpu_custom_call.1} parent=11 // pred_fallthru
          _
      $region12: #{tpu_custom_call.1} parent=5 // pred_fallthru
        _
      %p224 = scmp.lt.s32.totalorder %s13, 3
      // Predicated region
      $region37: #{tpu_custom_call.1} parent=5 // pred_check
        %p225 = pneg %p224
      $region38: #{tpu_custom_call.1} parent=5 // pred_check_branch
        %227 = sbr.rel (%p225) target = $region40
      $region39: #{tpu_custom_call.1} parent=5 // pred_region
        // Predicated region
        $region41: #{tpu_custom_call.1} parent=39 // pred_check
          %p228 = pneg %p33
        $region42: #{tpu_custom_call.1} parent=39 // pred_check_branch
          %230 = sbr.rel (%p228) target = $region44
        $region43: #{tpu_custom_call.1} parent=39 // pred_region
          %s231 = smul.u32 48, %s13
          %s232 = ssub.s32 125, %s231
          %p233 = scmp.lt.s32.totalorder %s232, 48
          %s234 = scalar_select %p233, %s232, 48
          %s235 = smul.u32 8, %s234
          %p236 = scmp.lt.s32.totalorder %s231, 124
          %s237 = scalar_select %p236, %s231, 124
          %s238 = smul.addr %s237, 8
          %s239 = scalar_lea.vmem %s0, %s238
          %s240 = smul.u32 48, %s13
          %s241 = ssub.s32 125, %s240
          %p242 = scmp.lt.s32.totalorder %s241, 48
          %s243 = scalar_select %p242, %s241, 48
          %s244 = smul.u32 8, %s243
        $region44: #{tpu_custom_call.1} parent=39 // pred_fallthru
          _
      $region40: #{tpu_custom_call.1} parent=5 // pred_fallthru
        _
      %p245 = scmp.le.s32.totalorder 1, %s13
      %p246 = scmp.lt.s32.totalorder %s13, 4
      %p247 = pnand %p245, %p246
      %p248 = pneg %p247
      // Predicated region
      $region45: #{tpu_custom_call.1} parent=5 // pred_check
        _
      $region46: #{tpu_custom_call.1} parent=5 // pred_check_branch
        %250 = sbr.rel (%p247) target = $region48
      $region47: #{tpu_custom_call.1} parent=5 // pred_region
        %s251 = ssub.s32 %s13, 1
        %s252 = smul.u32 48, %s18
        %s253 = ssub.s32 125, %s252
        %p254 = scmp.lt.s32.totalorder %s253, 48
        %s255 = scalar_select %p254, %s253, 48
        %s256 = smul.u32 8, %s255
        %p257 = scmp.lt.s32.totalorder %s252, 124
        %s258 = scalar_select %p257, %s252, 124
        %s259 = smul.addr %s258, 8
        %s260 = scalar_lea.vmem %s0, %s259
        %p261 = pneg %p39
        %p262 = pneg %p36
        %p263 = pneg %p60
        %p264 = pneg %p57
        %p265 = pneg %p81
        %p266 = pneg %p78
        %p267 = pneg %p102
        %p268 = pneg %p99
        %p269 = pneg %p123
        %p270 = pneg %p120
        %p271 = pneg %p144
        %p272 = pneg %p141
        %p273 = pneg %p165
        %p274 = pneg %p162
        %p275 = pneg %p191
        %p276 = pneg %p188
        %s277 = sand.u32 %s178, 1
        %s278 = sand.u32 %s178, 1
        %s279 = smul.addr %s278, 384
        %s280 = scalar_lea.vmem [#allocation2], %s279
        %s281 = smul.u32 48, %s18
        %s282 = ssub.s32 125, %s281
        %p283 = scmp.lt.s32.totalorder %s282, 48
        %s284 = scalar_select %p283, %s282, 48
        %s285 = smul.u32 8, %s284
        %p286 = scmp.lt.s32.totalorder %s281, 124
        %s287 = scalar_select %p286, %s281, 124
        %s288 = smul.addr %s287, 8
        %s289 = scalar_lea.vmem %s0, %s288
        %s290 = smul.u32 48, %s18
        %s291 = ssub.s32 125, %s290
        %p292 = scmp.lt.s32.totalorder %s291, 48
        %s293 = scalar_select %p292, %s291, 48
        %s294 = smul.u32 8, %s293
        %s295 = smul.u32 48, %s18
        %s296 = ssub.s32 125, %s295
        %p297 = scmp.lt.s32.totalorder %s296, 48
        %s298 = scalar_select %p297, %s296, 48
        %s299 = smul.u32 8, %s298
        %v301 = vld [vmem:[%s289] sm:$0xff]
        %v302 = vld [vmem:[%s289 + $0x8] sm:$0xff]
        %v303 = vld [vmem:[%s289 + $0x10] sm:$0xff]
        %v304 = vld [vmem:[%s289 + $0x18] sm:$0xff]
        %v305 = vld [vmem:[%s289 + $0x20] sm:$0xff]
        %v306 = vld [vmem:[%s289 + $0x28] sm:$0xff]
        %v307 = vld [vmem:[%s289 + $0x30] sm:$0xff]
        %v308 = vld [vmem:[%s289 + $0x38] sm:$0xff]
        %v309 = vld [vmem:[%s289 + $0x40] sm:$0xff]
        %v310 = vld [vmem:[%s289 + $0x48] sm:$0xff]
        %v311 = vld [vmem:[%s289 + $0x50] sm:$0xff]
        %v312 = vld [vmem:[%s289 + $0x58] sm:$0xff]
        %v313 = vld [vmem:[%s289 + $0x60] sm:$0xff]
        %v314 = vld [vmem:[%s289 + $0x68] sm:$0xff]
        %v315 = vld [vmem:[%s289 + $0x70] sm:$0xff]
        %v316 = vld [vmem:[%s289 + $0x78] sm:$0xff]
        %v317 = vld [vmem:[%s289 + $0x80] sm:$0xff]
        %v318 = vld [vmem:[%s289 + $0x88] sm:$0xff]
        %v319 = vld [vmem:[%s289 + $0x90] sm:$0xff]
        %v320 = vld [vmem:[%s289 + $0x98] sm:$0xff]
        %v321 = vld [vmem:[%s289 + $0xa0] sm:$0xff]
        %v322 = vld [vmem:[%s289 + $0xa8] sm:$0xff]
        %v323 = vld [vmem:[%s289 + $0xb0] sm:$0xff]
        %v324 = vld [vmem:[%s289 + $0xb8] sm:$0xff]
        %v325 = vld [vmem:[%s289 + $0xc0] sm:$0xff]
        %v326 = vld [vmem:[%s289 + $0xc8] sm:$0xff]
        %v327 = vld [vmem:[%s289 + $0xd0] sm:$0xff]
        %v328 = vld [vmem:[%s289 + $0xd8] sm:$0xff]
        %v329 = vld [vmem:[%s289 + $0xe0] sm:$0xff]
        %v330 = vld [vmem:[%s289 + $0xe8] sm:$0xff]
        %v331 = vld [vmem:[%s289 + $0xf0] sm:$0xff]
        %v332 = vld [vmem:[%s289 + $0xf8] sm:$0xff]
        %v333 = vld [vmem:[%s289 + $0x100] sm:$0xff]
        %v334 = vld [vmem:[%s289 + $0x108] sm:$0xff]
        %v335 = vld [vmem:[%s289 + $0x110] sm:$0xff]
        %v336 = vld [vmem:[%s289 + $0x118] sm:$0xff]
        %v337 = vld [vmem:[%s289 + $0x120] sm:$0xff]
        %v338 = vld [vmem:[%s289 + $0x128] sm:$0xff]
        %v339 = vld [vmem:[%s289 + $0x130] sm:$0xff]
        %v340 = vld [vmem:[%s289 + $0x138] sm:$0xff]
        %v341 = vld [vmem:[%s289 + $0x140] sm:$0xff]
        %v342 = vld [vmem:[%s289 + $0x148] sm:$0xff]
        %v343 = vld [vmem:[%s289 + $0x150] sm:$0xff]
        %v344 = vld [vmem:[%s289 + $0x158] sm:$0xff]
        %v345 = vld [vmem:[%s289 + $0x160] sm:$0xff]
        %v346 = vld [vmem:[%s289 + $0x168] sm:$0xff]
        %v347 = vld [vmem:[%s289 + $0x170] sm:$0xff]
        %v348 = vld [vmem:[%s289 + $0x178] sm:$0xff]
        %v349 = vpack.c.bf16 %v302, %v301
        %v350 = vpack.c.bf16 %v304, %v303
        %v351 = vpack.c.bf16 %v306, %v305
        %v352 = vpack.c.bf16 %v308, %v307
        %v353 = vpack.c.bf16 %v310, %v309
        %v354 = vpack.c.bf16 %v312, %v311
        %v355 = vpack.c.bf16 %v314, %v313
        %v356 = vpack.c.bf16 %v316, %v315
        %v357 = vpack.c.bf16 %v318, %v317
        %v358 = vpack.c.bf16 %v320, %v319
        %v359 = vpack.c.bf16 %v322, %v321
        %v360 = vpack.c.bf16 %v324, %v323
        %v361 = vpack.c.bf16 %v326, %v325
        %v362 = vpack.c.bf16 %v328, %v327
        %v363 = vpack.c.bf16 %v330, %v329
        %v364 = vpack.c.bf16 %v332, %v331
        %v365 = vpack.c.bf16 %v334, %v333
        %v366 = vpack.c.bf16 %v336, %v335
        %v367 = vpack.c.bf16 %v338, %v337
        %v368 = vpack.c.bf16 %v340, %v339
        %v369 = vpack.c.bf16 %v342, %v341
        %v370 = vpack.c.bf16 %v344, %v343
        %v371 = vpack.c.bf16 %v346, %v345
        %v372 = vpack.c.bf16 %v348, %v347
        %v373 = vld [vmem:[%s1] sm:$0xf]
        %v374 = vld [vmem:[%s1 + $0x4] sm:$0xf]
        %v375 = vld [vmem:[%s2] sm:$0x1]
        %v377 = vperm.slane %v375, 0
        %v381 = vunpack.c.l.b16 %v373
        %v382 = vunpack.c.l.b16 %v374
        %v383 = vpack.c.b16 %v382, %v381
        %vm385 = vcmask 130048
        %v387 = vsel %vm385, %v349, 0
        %v390 = vsel %vm385, %v350, 0
        %v393 = vsel %vm385, %v351, 0
        %v396 = vsel %vm385, %v352, 0
        %v399 = vsel %vm385, %v353, 0
        %v402 = vsel %vm385, %v354, 0
        %v405 = vsel %vm385, %v355, 0
        %v408 = vsel %vm385, %v356, 0
        %v411 = vsel %vm385, %v357, 0
        %v414 = vsel %vm385, %v358, 0
        %v417 = vsel %vm385, %v359, 0
        %v420 = vsel %vm385, %v360, 0
        %v423 = vsel %vm385, %v361, 0
        %v426 = vsel %vm385, %v362, 0
        %v429 = vsel %vm385, %v363, 0
        %v432 = vsel %vm385, %v364, 0
        %v435 = vsel %vm385, %v365, 0
        %v438 = vsel %vm385, %v366, 0
        %v441 = vsel %vm385, %v367, 0
        %v444 = vsel %vm385, %v368, 0
        %v447 = vsel %vm385, %v369, 0
        %v450 = vsel %vm385, %v370, 0
        %v453 = vsel %vm385, %v371, 0
        %v456 = vsel %vm385, %v372, 0
        %458 = vmatpush.bf16.msra.mxu0 0
        %459 = vmatpush.bf16.msra.mxu0 0
        %460 = vmatpush.bf16.msra.mxu0 0
        %461 = vmatpush.bf16.msra.mxu0 0
        %462 = vmatpush.bf16.msra.mxu0 0
        %463 = vmatpush.bf16.msra.mxu0 0
        %464 = vmatpush.bf16.msra.mxu0 0
        %465 = vmatpush.bf16.msra.mxu0 %v383
        %466 = vmatmul.bf16.gmra.mxu0 %v387
        %v467 = vpop.f32.mrf.mxu0
        %v468 = vadd.f32 %v377, %v467
        %v469 = vpop.f32.mrf.mxu0
        %v470 = vadd.f32 %v377, %v469
        %471 = vmatmul.bf16.gmra.mxu0 %v390
        %v472 = vpop.f32.mrf.mxu0
        %v473 = vadd.f32 %v377, %v472
        %v474 = vpop.f32.mrf.mxu0
        %v475 = vadd.f32 %v377, %v474
        %476 = vmatmul.bf16.gmra.mxu0 %v393
        %v477 = vpop.f32.mrf.mxu0
        %v478 = vadd.f32 %v377, %v477
        %v479 = vpop.f32.mrf.mxu0
        %v480 = vadd.f32 %v377, %v479
        %481 = vmatmul.bf16.gmra.mxu0 %v396
        %v482 = vpop.f32.mrf.mxu0
        %v483 = vadd.f32 %v377, %v482
        %v484 = vpop.f32.mrf.mxu0
        %v485 = vadd.f32 %v377, %v484
        %486 = vmatmul.bf16.gmra.mxu0 %v399
        %v487 = vpop.f32.mrf.mxu0
        %v488 = vadd.f32 %v377, %v487
        %v489 = vpop.f32.mrf.mxu0
        %v490 = vadd.f32 %v377, %v489
        %491 = vmatmul.bf16.gmra.mxu0 %v402
        %v492 = vpop.f32.mrf.mxu0
        %v493 = vadd.f32 %v377, %v492
        %v494 = vpop.f32.mrf.mxu0
        %v495 = vadd.f32 %v377, %v494
        %496 = vmatmul.bf16.gmra.mxu0 %v405
        %v497 = vpop.f32.mrf.mxu0
        %v498 = vadd.f32 %v377, %v497
        %v499 = vpop.f32.mrf.mxu0
        %v500 = vadd.f32 %v377, %v499
        %501 = vmatmul.bf16.gmra.mxu0 %v408
        %v502 = vpop.f32.mrf.mxu0
        %v503 = vadd.f32 %v377, %v502
        %v504 = vpop.f32.mrf.mxu0
        %v505 = vadd.f32 %v377, %v504
        %506 = vmatmul.bf16.gmra.mxu0 %v411
        %v507 = vpop.f32.mrf.mxu0
        %v508 = vadd.f32 %v377, %v507
        %v509 = vpop.f32.mrf.mxu0
        %v510 = vadd.f32 %v377, %v509
        %511 = vmatmul.bf16.gmra.mxu0 %v414
        %v512 = vpop.f32.mrf.mxu0
        %v513 = vadd.f32 %v377, %v512
        %v514 = vpop.f32.mrf.mxu0
        %v515 = vadd.f32 %v377, %v514
        %516 = vmatmul.bf16.gmra.mxu0 %v417
        %v517 = vpop.f32.mrf.mxu0
        %v518 = vadd.f32 %v377, %v517
        %v519 = vpop.f32.mrf.mxu0
        %v520 = vadd.f32 %v377, %v519
        %521 = vmatmul.bf16.gmra.mxu0 %v420
        %v522 = vpop.f32.mrf.mxu0
        %v523 = vadd.f32 %v377, %v522
        %v524 = vpop.f32.mrf.mxu0
        %v525 = vadd.f32 %v377, %v524
        %526 = vmatmul.bf16.gmra.mxu0 %v423
        %v527 = vpop.f32.mrf.mxu0
        %v528 = vadd.f32 %v377, %v527
        %v529 = vpop.f32.mrf.mxu0
        %v530 = vadd.f32 %v377, %v529
        %531 = vmatmul.bf16.gmra.mxu0 %v426
        %v532 = vpop.f32.mrf.mxu0
        %v533 = vadd.f32 %v377, %v532
        %v534 = vpop.f32.mrf.mxu0
        %v535 = vadd.f32 %v377, %v534
        %536 = vmatmul.bf16.gmra.mxu0 %v429
        %v537 = vpop.f32.mrf.mxu0
        %v538 = vadd.f32 %v377, %v537
        %v539 = vpop.f32.mrf.mxu0
        %v540 = vadd.f32 %v377, %v539
        %541 = vmatmul.bf16.gmra.mxu0 %v432
        %v542 = vpop.f32.mrf.mxu0
        %v543 = vadd.f32 %v377, %v542
        %v544 = vpop.f32.mrf.mxu0
        %v545 = vadd.f32 %v377, %v544
        %546 = vmatmul.bf16.gmra.mxu0 %v435
        %v547 = vpop.f32.mrf.mxu0
        %v548 = vadd.f32 %v377, %v547
        %v549 = vpop.f32.mrf.mxu0
        %v550 = vadd.f32 %v377, %v549
        %551 = vmatmul.bf16.gmra.mxu0 %v438
        %v552 = vpop.f32.mrf.mxu0
        %v553 = vadd.f32 %v377, %v552
        %v554 = vpop.f32.mrf.mxu0
        %v555 = vadd.f32 %v377, %v554
        %556 = vmatmul.bf16.gmra.mxu0 %v441
        %v557 = vpop.f32.mrf.mxu0
        %v558 = vadd.f32 %v377, %v557
        %v559 = vpop.f32.mrf.mxu0
        %v560 = vadd.f32 %v377, %v559
        %561 = vmatmul.bf16.gmra.mxu0 %v444
        %v562 = vpop.f32.mrf.mxu0
        %v563 = vadd.f32 %v377, %v562
        %v564 = vpop.f32.mrf.mxu0
        %v565 = vadd.f32 %v377, %v564
        %566 = vmatmul.bf16.gmra.mxu0 %v447
        %v567 = vpop.f32.mrf.mxu0
        %v568 = vadd.f32 %v377, %v567
        %v569 = vpop.f32.mrf.mxu0
        %v570 = vadd.f32 %v377, %v569
        %571 = vmatmul.bf16.gmra.mxu0 %v450
        %v572 = vpop.f32.mrf.mxu0
        %v573 = vadd.f32 %v377, %v572
        %v574 = vpop.f32.mrf.mxu0
        %v575 = vadd.f32 %v377, %v574
        %576 = vmatmul.bf16.gmra.mxu0 %v453
        %v577 = vpop.f32.mrf.mxu0
        %v578 = vadd.f32 %v377, %v577
        %v579 = vpop.f32.mrf.mxu0
        %v580 = vadd.f32 %v377, %v579
        %581 = vmatmul.bf16.gmra.mxu0 %v456
        %v582 = vpop.f32.mrf.mxu0
        %v583 = vadd.f32 %v377, %v582
        %v584 = vpop.f32.mrf.mxu0
        %v585 = vadd.f32 %v377, %v584
        %586 = vdwg.mxu0
        %v587 = vmax.f32 %v468, 0.0
        %v588 = vmax.f32 %v470, 0.0
        %v589 = vmax.f32 %v473, 0.0
        %v590 = vmax.f32 %v475, 0.0
        %v591 = vmax.f32 %v478, 0.0
        %v592 = vmax.f32 %v480, 0.0
        %v593 = vmax.f32 %v483, 0.0
        %v594 = vmax.f32 %v485, 0.0
        %v595 = vmax.f32 %v488, 0.0
        %v596 = vmax.f32 %v490, 0.0
        %v597 = vmax.f32 %v493, 0.0
        %v598 = vmax.f32 %v495, 0.0
        %v599 = vmax.f32 %v498, 0.0
        %v600 = vmax.f32 %v500, 0.0
        %v601 = vmax.f32 %v503, 0.0
        %v602 = vmax.f32 %v505, 0.0
        %v603 = vmax.f32 %v508, 0.0
        %v604 = vmax.f32 %v510, 0.0
        %v605 = vmax.f32 %v513, 0.0
        %v606 = vmax.f32 %v515, 0.0
        %v607 = vmax.f32 %v518, 0.0
        %v608 = vmax.f32 %v520, 0.0
        %v609 = vmax.f32 %v523, 0.0
        %v610 = vmax.f32 %v525, 0.0
        %v611 = vmax.f32 %v528, 0.0
        %v612 = vmax.f32 %v530, 0.0
        %v613 = vmax.f32 %v533, 0.0
        %v614 = vmax.f32 %v535, 0.0
        %v615 = vmax.f32 %v538, 0.0
        %v616 = vmax.f32 %v540, 0.0
        %v617 = vmax.f32 %v543, 0.0
        %v618 = vmax.f32 %v545, 0.0
        %v619 = vmax.f32 %v548, 0.0
        %v620 = vmax.f32 %v550, 0.0
        %v621 = vmax.f32 %v553, 0.0
        %v622 = vmax.f32 %v555, 0.0
        %v623 = vmax.f32 %v558, 0.0
        %v624 = vmax.f32 %v560, 0.0
        %v625 = vmax.f32 %v563, 0.0
        %v626 = vmax.f32 %v565, 0.0
        %v627 = vmax.f32 %v568, 0.0
        %v628 = vmax.f32 %v570, 0.0
        %v629 = vmax.f32 %v573, 0.0
        %v630 = vmax.f32 %v575, 0.0
        %v631 = vmax.f32 %v578, 0.0
        %v632 = vmax.f32 %v580, 0.0
        %v633 = vmax.f32 %v583, 0.0
        %v634 = vmax.f32 %v585, 0.0
        %v635 = vpack.c.bf16 %v588, %v587
        %v636 = vpack.c.bf16 %v590, %v589
        %v637 = vpack.c.bf16 %v592, %v591
        %v638 = vpack.c.bf16 %v594, %v593
        %v639 = vpack.c.bf16 %v596, %v595
        %v640 = vpack.c.bf16 %v598, %v597
        %v641 = vpack.c.bf16 %v600, %v599
        %v642 = vpack.c.bf16 %v602, %v601
        %v643 = vpack.c.bf16 %v604, %v603
        %v644 = vpack.c.bf16 %v606, %v605
        %v645 = vpack.c.bf16 %v608, %v607
        %v646 = vpack.c.bf16 %v610, %v609
        %v647 = vpack.c.bf16 %v612, %v611
        %v648 = vpack.c.bf16 %v614, %v613
        %v649 = vpack.c.bf16 %v616, %v615
        %v650 = vpack.c.bf16 %v618, %v617
        %v651 = vpack.c.bf16 %v620, %v619
        %v652 = vpack.c.bf16 %v622, %v621
        %v653 = vpack.c.bf16 %v624, %v623
        %v654 = vpack.c.bf16 %v626, %v625
        %v655 = vpack.c.bf16 %v628, %v627
        %v656 = vpack.c.bf16 %v630, %v629
        %v657 = vpack.c.bf16 %v632, %v631
        %v658 = vpack.c.bf16 %v634, %v633
        %v659 = vld [vmem:[%s3] sm:$0xf]
        %v660 = vld [vmem:[%s3 + $0x4] sm:$0xf]
        %v661 = vld [vmem:[%s3 + $0x8] sm:$0xf]
        %v662 = vld [vmem:[%s3 + $0xc] sm:$0xf]
        %v663 = vld [vmem:[%s4] sm:$0x1]
        %v665 = vperm.slane %v663, 0
        %v671 = vunpack.c.l.b16 %v659
        %v672 = vunpack.c.l.b16 %v660
        %v673 = vunpack.c.l.b16 %v661
        %v674 = vunpack.c.l.b16 %v662
        %v675 = vpack.c.b16 %v672, %v671
        %v676 = vpack.c.b16 %v674, %v673
        %vm679 = vcmask 261120
        %v681 = vsel %vm679, %v635, 0
        %v684 = vsel %vm679, %v636, 0
        %v687 = vsel %vm679, %v637, 0
        %v690 = vsel %vm679, %v638, 0
        %v693 = vsel %vm679, %v639, 0
        %v696 = vsel %vm679, %v640, 0
        %v699 = vsel %vm679, %v641, 0
        %v702 = vsel %vm679, %v642, 0
        %v705 = vsel %vm679, %v643, 0
        %v708 = vsel %vm679, %v644, 0
        %v711 = vsel %vm679, %v645, 0
        %v714 = vsel %vm679, %v646, 0
        %v717 = vsel %vm679, %v647, 0
        %v720 = vsel %vm679, %v648, 0
        %v723 = vsel %vm679, %v649, 0
        %v726 = vsel %vm679, %v650, 0
        %v729 = vsel %vm679, %v651, 0
        %v732 = vsel %vm679, %v652, 0
        %v735 = vsel %vm679, %v653, 0
        %v738 = vsel %vm679, %v654, 0
        %v741 = vsel %vm679, %v655, 0
        %v744 = vsel %vm679, %v656, 0
        %v747 = vsel %vm679, %v657, 0
        %v750 = vsel %vm679, %v658, 0
        %752 = vmatpush.bf16.msra.mxu0 0
        %753 = vmatpush.bf16.msra.mxu0 0
        %754 = vmatpush.bf16.msra.mxu0 0
        %755 = vmatpush.bf16.msra.mxu0 0
        %756 = vmatpush.bf16.msra.mxu0 0
        %757 = vmatpush.bf16.msra.mxu0 0
        %758 = vmatpush.bf16.msra.mxu0 %v676
        %759 = vmatpush.bf16.msra.mxu0 %v675
        %760 = vmatmul.bf16.gmra.mxu0 %v681
        %v761 = vpop.f32.mrf.mxu0
        %v762 = vadd.f32 %v665, %v761
        %v763 = vpop.f32.mrf.mxu0
        %v764 = vadd.f32 %v665, %v763
        %765 = vmatmul.bf16.gmra.mxu0 %v684
        %v766 = vpop.f32.mrf.mxu0
        %v767 = vadd.f32 %v665, %v766
        %v768 = vpop.f32.mrf.mxu0
        %v769 = vadd.f32 %v665, %v768
        %770 = vmatmul.bf16.gmra.mxu0 %v687
        %v771 = vpop.f32.mrf.mxu0
        %v772 = vadd.f32 %v665, %v771
        %v773 = vpop.f32.mrf.mxu0
        %v774 = vadd.f32 %v665, %v773
        %775 = vmatmul.bf16.gmra.mxu0 %v690
        %v776 = vpop.f32.mrf.mxu0
        %v777 = vadd.f32 %v665, %v776
        %v778 = vpop.f32.mrf.mxu0
        %v779 = vadd.f32 %v665, %v778
        %780 = vmatmul.bf16.gmra.mxu0 %v693
        %v781 = vpop.f32.mrf.mxu0
        %v782 = vadd.f32 %v665, %v781
        %v783 = vpop.f32.mrf.mxu0
        %v784 = vadd.f32 %v665, %v783
        %785 = vmatmul.bf16.gmra.mxu0 %v696
        %v786 = vpop.f32.mrf.mxu0
        %v787 = vadd.f32 %v665, %v786
        %v788 = vpop.f32.mrf.mxu0
        %v789 = vadd.f32 %v665, %v788
        %790 = vmatmul.bf16.gmra.mxu0 %v699
        %v791 = vpop.f32.mrf.mxu0
        %v792 = vadd.f32 %v665, %v791
        %v793 = vpop.f32.mrf.mxu0
        %v794 = vadd.f32 %v665, %v793
        %795 = vmatmul.bf16.gmra.mxu0 %v702
        %v796 = vpop.f32.mrf.mxu0
        %v797 = vadd.f32 %v665, %v796
        %v798 = vpop.f32.mrf.mxu0
        %v799 = vadd.f32 %v665, %v798
        %800 = vmatmul.bf16.gmra.mxu0 %v705
        %v801 = vpop.f32.mrf.mxu0
        %v802 = vadd.f32 %v665, %v801
        %v803 = vpop.f32.mrf.mxu0
        %v804 = vadd.f32 %v665, %v803
        %805 = vmatmul.bf16.gmra.mxu0 %v708
        %v806 = vpop.f32.mrf.mxu0
        %v807 = vadd.f32 %v665, %v806
        %v808 = vpop.f32.mrf.mxu0
        %v809 = vadd.f32 %v665, %v808
        %810 = vmatmul.bf16.gmra.mxu0 %v711
        %v811 = vpop.f32.mrf.mxu0
        %v812 = vadd.f32 %v665, %v811
        %v813 = vpop.f32.mrf.mxu0
        %v814 = vadd.f32 %v665, %v813
        %815 = vmatmul.bf16.gmra.mxu0 %v714
        %v816 = vpop.f32.mrf.mxu0
        %v817 = vadd.f32 %v665, %v816
        %v818 = vpop.f32.mrf.mxu0
        %v819 = vadd.f32 %v665, %v818
        %820 = vmatmul.bf16.gmra.mxu0 %v717
        %v821 = vpop.f32.mrf.mxu0
        %v822 = vadd.f32 %v665, %v821
        %v823 = vpop.f32.mrf.mxu0
        %v824 = vadd.f32 %v665, %v823
        %825 = vmatmul.bf16.gmra.mxu0 %v720
        %v826 = vpop.f32.mrf.mxu0
        %v827 = vadd.f32 %v665, %v826
        %v828 = vpop.f32.mrf.mxu0
        %v829 = vadd.f32 %v665, %v828
        %830 = vmatmul.bf16.gmra.mxu0 %v723
        %v831 = vpop.f32.mrf.mxu0
        %v832 = vadd.f32 %v665, %v831
        %v833 = vpop.f32.mrf.mxu0
        %v834 = vadd.f32 %v665, %v833
        %835 = vmatmul.bf16.gmra.mxu0 %v726
        %v836 = vpop.f32.mrf.mxu0
        %v837 = vadd.f32 %v665, %v836
        %v838 = vpop.f32.mrf.mxu0
        %v839 = vadd.f32 %v665, %v838
        %840 = vmatmul.bf16.gmra.mxu0 %v729
        %v841 = vpop.f32.mrf.mxu0
        %v842 = vadd.f32 %v665, %v841
        %v843 = vpop.f32.mrf.mxu0
        %v844 = vadd.f32 %v665, %v843
        %845 = vmatmul.bf16.gmra.mxu0 %v732
        %v846 = vpop.f32.mrf.mxu0
        %v847 = vadd.f32 %v665, %v846
        %v848 = vpop.f32.mrf.mxu0
        %v849 = vadd.f32 %v665, %v848
        %850 = vmatmul.bf16.gmra.mxu0 %v735
        %v851 = vpop.f32.mrf.mxu0
        %v852 = vadd.f32 %v665, %v851
        %v853 = vpop.f32.mrf.mxu0
        %v854 = vadd.f32 %v665, %v853
        %855 = vmatmul.bf16.gmra.mxu0 %v738
        %v856 = vpop.f32.mrf.mxu0
        %v857 = vadd.f32 %v665, %v856
        %v858 = vpop.f32.mrf.mxu0
        %v859 = vadd.f32 %v665, %v858
        %860 = vmatmul.bf16.gmra.mxu0 %v741
        %v861 = vpop.f32.mrf.mxu0
        %v862 = vadd.f32 %v665, %v861
        %v863 = vpop.f32.mrf.mxu0
        %v864 = vadd.f32 %v665, %v863
        %865 = vmatmul.bf16.gmra.mxu0 %v744
        %v866 = vpop.f32.mrf.mxu0
        %v867 = vadd.f32 %v665, %v866
        %v868 = vpop.f32.mrf.mxu0
        %v869 = vadd.f32 %v665, %v868
        %870 = vmatmul.bf16.gmra.mxu0 %v747
        %v871 = vpop.f32.mrf.mxu0
        %v872 = vadd.f32 %v665, %v871
        %v873 = vpop.f32.mrf.mxu0
        %v874 = vadd.f32 %v665, %v873
        %875 = vmatmul.bf16.gmra.mxu0 %v750
        %v876 = vpop.f32.mrf.mxu0
        %v877 = vadd.f32 %v665, %v876
        %v878 = vpop.f32.mrf.mxu0
        %v879 = vadd.f32 %v665, %v878
        %880 = vdwg.mxu0
        %v881 = vmax.f32 %v762, 0.0
        %v882 = vmax.f32 %v764, 0.0
        %v883 = vmax.f32 %v767, 0.0
        %v884 = vmax.f32 %v769, 0.0
        %v885 = vmax.f32 %v772, 0.0
        %v886 = vmax.f32 %v774, 0.0
        %v887 = vmax.f32 %v777, 0.0
        %v888 = vmax.f32 %v779, 0.0
        %v889 = vmax.f32 %v782, 0.0
        %v890 = vmax.f32 %v784, 0.0
        %v891 = vmax.f32 %v787, 0.0
        %v892 = vmax.f32 %v789, 0.0
        %v893 = vmax.f32 %v792, 0.0
        %v894 = vmax.f32 %v794, 0.0
        %v895 = vmax.f32 %v797, 0.0
        %v896 = vmax.f32 %v799, 0.0
        %v897 = vmax.f32 %v802, 0.0
        %v898 = vmax.f32 %v804, 0.0
        %v899 = vmax.f32 %v807, 0.0
        %v900 = vmax.f32 %v809, 0.0
        %v901 = vmax.f32 %v812, 0.0
        %v902 = vmax.f32 %v814, 0.0
        %v903 = vmax.f32 %v817, 0.0
        %v904 = vmax.f32 %v819, 0.0
        %v905 = vmax.f32 %v822, 0.0
        %v906 = vmax.f32 %v824, 0.0
        %v907 = vmax.f32 %v827, 0.0
        %v908 = vmax.f32 %v829, 0.0
        %v909 = vmax.f32 %v832, 0.0
        %v910 = vmax.f32 %v834, 0.0
        %v911 = vmax.f32 %v837, 0.0
        %v912 = vmax.f32 %v839, 0.0
        %v913 = vmax.f32 %v842, 0.0
        %v914 = vmax.f32 %v844, 0.0
        %v915 = vmax.f32 %v847, 0.0
        %v916 = vmax.f32 %v849, 0.0
        %v917 = vmax.f32 %v852, 0.0
        %v918 = vmax.f32 %v854, 0.0
        %v919 = vmax.f32 %v857, 0.0
        %v920 = vmax.f32 %v859, 0.0
        %v921 = vmax.f32 %v862, 0.0
        %v922 = vmax.f32 %v864, 0.0
        %v923 = vmax.f32 %v867, 0.0
        %v924 = vmax.f32 %v869, 0.0
        %v925 = vmax.f32 %v872, 0.0
        %v926 = vmax.f32 %v874, 0.0
        %v927 = vmax.f32 %v877, 0.0
        %v928 = vmax.f32 %v879, 0.0
        %v929 = vpack.c.bf16 %v882, %v881
        %v930 = vpack.c.bf16 %v884, %v883
        %v931 = vpack.c.bf16 %v886, %v885
        %v932 = vpack.c.bf16 %v888, %v887
        %v933 = vpack.c.bf16 %v890, %v889
        %v934 = vpack.c.bf16 %v892, %v891
        %v935 = vpack.c.bf16 %v894, %v893
        %v936 = vpack.c.bf16 %v896, %v895
        %v937 = vpack.c.bf16 %v898, %v897
        %v938 = vpack.c.bf16 %v900, %v899
        %v939 = vpack.c.bf16 %v902, %v901
        %v940 = vpack.c.bf16 %v904, %v903
        %v941 = vpack.c.bf16 %v906, %v905
        %v942 = vpack.c.bf16 %v908, %v907
        %v943 = vpack.c.bf16 %v910, %v909
        %v944 = vpack.c.bf16 %v912, %v911
        %v945 = vpack.c.bf16 %v914, %v913
        %v946 = vpack.c.bf16 %v916, %v915
        %v947 = vpack.c.bf16 %v918, %v917
        %v948 = vpack.c.bf16 %v920, %v919
        %v949 = vpack.c.bf16 %v922, %v921
        %v950 = vpack.c.bf16 %v924, %v923
        %v951 = vpack.c.bf16 %v926, %v925
        %v952 = vpack.c.bf16 %v928, %v927
        %v953 = vld [vmem:[%s5] sm:$0xf]
        %v954 = vld [vmem:[%s5 + $0x4] sm:$0xf]
        %v955 = vld [vmem:[%s5 + $0x8] sm:$0xf]
        %v956 = vld [vmem:[%s5 + $0xc] sm:$0xf]
        %v957 = vld [vmem:[%s6] sm:$0x1]
        %v959 = vperm.slane %v957, 0
        %v965 = vunpack.c.l.b16 %v953
        %v966 = vunpack.c.l.b16 %v954
        %v967 = vunpack.c.l.b16 %v955
        %v968 = vunpack.c.l.b16 %v956
        %v969 = vpack.c.b16 %v966, %v965
        %v970 = vpack.c.b16 %v968, %v967
        %v974 = vsel %vm679, %v929, 0
        %v977 = vsel %vm679, %v930, 0
        %v980 = vsel %vm679, %v931, 0
        %v983 = vsel %vm679, %v932, 0
        %v986 = vsel %vm679, %v933, 0
        %v989 = vsel %vm679, %v934, 0
        %v992 = vsel %vm679, %v935, 0
        %v995 = vsel %vm679, %v936, 0
        %v998 = vsel %vm679, %v937, 0
        %v1001 = vsel %vm679, %v938, 0
        %v1004 = vsel %vm679, %v939, 0
        %v1007 = vsel %vm679, %v940, 0
        %v1010 = vsel %vm679, %v941, 0
        %v1013 = vsel %vm679, %v942, 0
        %v1016 = vsel %vm679, %v943, 0
        %v1019 = vsel %vm679, %v944, 0
        %v1022 = vsel %vm679, %v945, 0
        %v1025 = vsel %vm679, %v946, 0
        %v1028 = vsel %vm679, %v947, 0
        %v1031 = vsel %vm679, %v948, 0
        %v1034 = vsel %vm679, %v949, 0
        %v1037 = vsel %vm679, %v950, 0
        %v1040 = vsel %vm679, %v951, 0
        %v1043 = vsel %vm679, %v952, 0
        %1045 = vmatpush.bf16.msra.mxu0 0
        %1046 = vmatpush.bf16.msra.mxu0 0
        %1047 = vmatpush.bf16.msra.mxu0 0
        %1048 = vmatpush.bf16.msra.mxu0 0
        %1049 = vmatpush.bf16.msra.mxu0 0
        %1050 = vmatpush.bf16.msra.mxu0 0
        %1051 = vmatpush.bf16.msra.mxu0 %v970
        %1052 = vmatpush.bf16.msra.mxu0 %v969
        %1053 = vmatmul.bf16.gmra.mxu0 %v974
        %v1054 = vpop.f32.mrf.mxu0
        %v1055 = vadd.f32 %v959, %v1054
        %v1056 = vpop.f32.mrf.mxu0
        %v1057 = vadd.f32 %v959, %v1056
        %1058 = vmatmul.bf16.gmra.mxu0 %v977
        %v1059 = vpop.f32.mrf.mxu0
        %v1060 = vadd.f32 %v959, %v1059
        %v1061 = vpop.f32.mrf.mxu0
        %v1062 = vadd.f32 %v959, %v1061
        %1063 = vmatmul.bf16.gmra.mxu0 %v980
        %v1064 = vpop.f32.mrf.mxu0
        %v1065 = vadd.f32 %v959, %v1064
        %v1066 = vpop.f32.mrf.mxu0
        %v1067 = vadd.f32 %v959, %v1066
        %1068 = vmatmul.bf16.gmra.mxu0 %v983
        %v1069 = vpop.f32.mrf.mxu0
        %v1070 = vadd.f32 %v959, %v1069
        %v1071 = vpop.f32.mrf.mxu0
        %v1072 = vadd.f32 %v959, %v1071
        %1073 = vmatmul.bf16.gmra.mxu0 %v986
        %v1074 = vpop.f32.mrf.mxu0
        %v1075 = vadd.f32 %v959, %v1074
        %v1076 = vpop.f32.mrf.mxu0
        %v1077 = vadd.f32 %v959, %v1076
        %1078 = vmatmul.bf16.gmra.mxu0 %v989
        %v1079 = vpop.f32.mrf.mxu0
        %v1080 = vadd.f32 %v959, %v1079
        %v1081 = vpop.f32.mrf.mxu0
        %v1082 = vadd.f32 %v959, %v1081
        %1083 = vmatmul.bf16.gmra.mxu0 %v992
        %v1084 = vpop.f32.mrf.mxu0
        %v1085 = vadd.f32 %v959, %v1084
        %v1086 = vpop.f32.mrf.mxu0
        %v1087 = vadd.f32 %v959, %v1086
        %1088 = vmatmul.bf16.gmra.mxu0 %v995
        %v1089 = vpop.f32.mrf.mxu0
        %v1090 = vadd.f32 %v959, %v1089
        %v1091 = vpop.f32.mrf.mxu0
        %v1092 = vadd.f32 %v959, %v1091
        %1093 = vmatmul.bf16.gmra.mxu0 %v998
        %v1094 = vpop.f32.mrf.mxu0
        %v1095 = vadd.f32 %v959, %v1094
        %v1096 = vpop.f32.mrf.mxu0
        %v1097 = vadd.f32 %v959, %v1096
        %1098 = vmatmul.bf16.gmra.mxu0 %v1001
        %v1099 = vpop.f32.mrf.mxu0
        %v1100 = vadd.f32 %v959, %v1099
        %v1101 = vpop.f32.mrf.mxu0
        %v1102 = vadd.f32 %v959, %v1101
        %1103 = vmatmul.bf16.gmra.mxu0 %v1004
        %v1104 = vpop.f32.mrf.mxu0
        %v1105 = vadd.f32 %v959, %v1104
        %v1106 = vpop.f32.mrf.mxu0
        %v1107 = vadd.f32 %v959, %v1106
        %1108 = vmatmul.bf16.gmra.mxu0 %v1007
        %v1109 = vpop.f32.mrf.mxu0
        %v1110 = vadd.f32 %v959, %v1109
        %v1111 = vpop.f32.mrf.mxu0
        %v1112 = vadd.f32 %v959, %v1111
        %1113 = vmatmul.bf16.gmra.mxu0 %v1010
        %v1114 = vpop.f32.mrf.mxu0
        %v1115 = vadd.f32 %v959, %v1114
        %v1116 = vpop.f32.mrf.mxu0
        %v1117 = vadd.f32 %v959, %v1116
        %1118 = vmatmul.bf16.gmra.mxu0 %v1013
        %v1119 = vpop.f32.mrf.mxu0
        %v1120 = vadd.f32 %v959, %v1119
        %v1121 = vpop.f32.mrf.mxu0
        %v1122 = vadd.f32 %v959, %v1121
        %1123 = vmatmul.bf16.gmra.mxu0 %v1016
        %v1124 = vpop.f32.mrf.mxu0
        %v1125 = vadd.f32 %v959, %v1124
        %v1126 = vpop.f32.mrf.mxu0
        %v1127 = vadd.f32 %v959, %v1126
        %1128 = vmatmul.bf16.gmra.mxu0 %v1019
        %v1129 = vpop.f32.mrf.mxu0
        %v1130 = vadd.f32 %v959, %v1129
        %v1131 = vpop.f32.mrf.mxu0
        %v1132 = vadd.f32 %v959, %v1131
        %1133 = vmatmul.bf16.gmra.mxu0 %v1022
        %v1134 = vpop.f32.mrf.mxu0
        %v1135 = vadd.f32 %v959, %v1134
        %v1136 = vpop.f32.mrf.mxu0
        %v1137 = vadd.f32 %v959, %v1136
        %1138 = vmatmul.bf16.gmra.mxu0 %v1025
        %v1139 = vpop.f32.mrf.mxu0
        %v1140 = vadd.f32 %v959, %v1139
        %v1141 = vpop.f32.mrf.mxu0
        %v1142 = vadd.f32 %v959, %v1141
        %1143 = vmatmul.bf16.gmra.mxu0 %v1028
        %v1144 = vpop.f32.mrf.mxu0
        %v1145 = vadd.f32 %v959, %v1144
        %v1146 = vpop.f32.mrf.mxu0
        %v1147 = vadd.f32 %v959, %v1146
        %1148 = vmatmul.bf16.gmra.mxu0 %v1031
        %v1149 = vpop.f32.mrf.mxu0
        %v1150 = vadd.f32 %v959, %v1149
        %v1151 = vpop.f32.mrf.mxu0
        %v1152 = vadd.f32 %v959, %v1151
        %1153 = vmatmul.bf16.gmra.mxu0 %v1034
        %v1154 = vpop.f32.mrf.mxu0
        %v1155 = vadd.f32 %v959, %v1154
        %v1156 = vpop.f32.mrf.mxu0
        %v1157 = vadd.f32 %v959, %v1156
        %1158 = vmatmul.bf16.gmra.mxu0 %v1037
        %v1159 = vpop.f32.mrf.mxu0
        %v1160 = vadd.f32 %v959, %v1159
        %v1161 = vpop.f32.mrf.mxu0
        %v1162 = vadd.f32 %v959, %v1161
        %1163 = vmatmul.bf16.gmra.mxu0 %v1040
        %v1164 = vpop.f32.mrf.mxu0
        %v1165 = vadd.f32 %v959, %v1164
        %v1166 = vpop.f32.mrf.mxu0
        %v1167 = vadd.f32 %v959, %v1166
        %1168 = vmatmul.bf16.gmra.mxu0 %v1043
        %v1169 = vpop.f32.mrf.mxu0
        %v1170 = vadd.f32 %v959, %v1169
        %v1171 = vpop.f32.mrf.mxu0
        %v1172 = vadd.f32 %v959, %v1171
        %1173 = vdwg.mxu0
        %v1174 = vxor.u32 %v1055, 2147483648
        %v1175 = vxor.u32 %v1057, 2147483648
        %v1176 = vxor.u32 %v1060, 2147483648
        %v1177 = vxor.u32 %v1062, 2147483648
        %v1178 = vxor.u32 %v1065, 2147483648
        %v1179 = vxor.u32 %v1067, 2147483648
        %v1180 = vxor.u32 %v1070, 2147483648
        %v1181 = vxor.u32 %v1072, 2147483648
        %v1182 = vxor.u32 %v1075, 2147483648
        %v1183 = vxor.u32 %v1077, 2147483648
        %v1184 = vxor.u32 %v1080, 2147483648
        %v1185 = vxor.u32 %v1082, 2147483648
        %v1186 = vxor.u32 %v1085, 2147483648
        %v1187 = vxor.u32 %v1087, 2147483648
        %v1188 = vxor.u32 %v1090, 2147483648
        %v1189 = vxor.u32 %v1092, 2147483648
        %v1190 = vxor.u32 %v1095, 2147483648
        %v1191 = vxor.u32 %v1097, 2147483648
        %v1192 = vxor.u32 %v1100, 2147483648
        %v1193 = vxor.u32 %v1102, 2147483648
        %v1194 = vxor.u32 %v1105, 2147483648
        %v1195 = vxor.u32 %v1107, 2147483648
        %v1196 = vxor.u32 %v1110, 2147483648
        %v1197 = vxor.u32 %v1112, 2147483648
        %v1198 = vxor.u32 %v1115, 2147483648
        %v1199 = vxor.u32 %v1117, 2147483648
        %v1200 = vxor.u32 %v1120, 2147483648
        %v1201 = vxor.u32 %v1122, 2147483648
        %v1202 = vxor.u32 %v1125, 2147483648
        %v1203 = vxor.u32 %v1127, 2147483648
        %v1204 = vxor.u32 %v1130, 2147483648
        %v1205 = vxor.u32 %v1132, 2147483648
        %v1206 = vxor.u32 %v1135, 2147483648
        %v1207 = vxor.u32 %v1137, 2147483648
        %v1208 = vxor.u32 %v1140, 2147483648
        %v1209 = vxor.u32 %v1142, 2147483648
        %v1210 = vxor.u32 %v1145, 2147483648
        %v1211 = vxor.u32 %v1147, 2147483648
        %v1212 = vxor.u32 %v1150, 2147483648
        %v1213 = vxor.u32 %v1152, 2147483648
        %v1214 = vxor.u32 %v1155, 2147483648
        %v1215 = vxor.u32 %v1157, 2147483648
        %v1216 = vxor.u32 %v1160, 2147483648
        %v1217 = vxor.u32 %v1162, 2147483648
        %v1218 = vxor.u32 %v1165, 2147483648
        %v1219 = vxor.u32 %v1167, 2147483648
        %v1220 = vxor.u32 %v1170, 2147483648
        %v1221 = vxor.u32 %v1172, 2147483648
        %v1222 = vmul.f32 %v1174, 1.442695
        %v1223 = vpow.pop %v1222
        %v1224 = vmul.f32 %v1175, 1.442695
        %v1225 = vpow.pop %v1224
        %v1226 = vmul.f32 %v1176, 1.442695
        %v1227 = vpow.pop %v1226
        %v1228 = vmul.f32 %v1177, 1.442695
        %v1229 = vpow.pop %v1228
        %v1230 = vmul.f32 %v1178, 1.442695
        %v1231 = vpow.pop %v1230
        %v1232 = vmul.f32 %v1179, 1.442695
        %v1233 = vpow.pop %v1232
        %v1234 = vmul.f32 %v1180, 1.442695
        %v1235 = vpow.pop %v1234
        %v1236 = vmul.f32 %v1181, 1.442695
        %v1237 = vpow.pop %v1236
        %v1238 = vmul.f32 %v1182, 1.442695
        %v1239 = vpow.pop %v1238
        %v1240 = vmul.f32 %v1183, 1.442695
        %v1241 = vpow.pop %v1240
        %v1242 = vmul.f32 %v1184, 1.442695
        %v1243 = vpow.pop %v1242
        %v1244 = vmul.f32 %v1185, 1.442695
        %v1245 = vpow.pop %v1244
        %v1246 = vmul.f32 %v1186, 1.442695
        %v1247 = vpow.pop %v1246
        %v1248 = vmul.f32 %v1187, 1.442695
        %v1249 = vpow.pop %v1248
        %v1250 = vmul.f32 %v1188, 1.442695
        %v1251 = vpow.pop %v1250
        %v1252 = vmul.f32 %v1189, 1.442695
        %v1253 = vpow.pop %v1252
        %v1254 = vmul.f32 %v1190, 1.442695
        %v1255 = vpow.pop %v1254
        %v1256 = vmul.f32 %v1191, 1.442695
        %v1257 = vpow.pop %v1256
        %v1258 = vmul.f32 %v1192, 1.442695
        %v1259 = vpow.pop %v1258
        %v1260 = vmul.f32 %v1193, 1.442695
        %v1261 = vpow.pop %v1260
        %v1262 = vmul.f32 %v1194, 1.442695
        %v1263 = vpow.pop %v1262
        %v1264 = vmul.f32 %v1195, 1.442695
        %v1265 = vpow.pop %v1264
        %v1266 = vmul.f32 %v1196, 1.442695
        %v1267 = vpow.pop %v1266
        %v1268 = vmul.f32 %v1197, 1.442695
        %v1269 = vpow.pop %v1268
        %v1270 = vmul.f32 %v1198, 1.442695
        %v1271 = vpow.pop %v1270
        %v1272 = vmul.f32 %v1199, 1.442695
        %v1273 = vpow.pop %v1272
        %v1274 = vmul.f32 %v1200, 1.442695
        %v1275 = vpow.pop %v1274
        %v1276 = vmul.f32 %v1201, 1.442695
        %v1277 = vpow.pop %v1276
        %v1278 = vmul.f32 %v1202, 1.442695
        %v1279 = vpow.pop %v1278
        %v1280 = vmul.f32 %v1203, 1.442695
        %v1281 = vpow.pop %v1280
        %v1282 = vmul.f32 %v1204, 1.442695
        %v1283 = vpow.pop %v1282
        %v1284 = vmul.f32 %v1205, 1.442695
        %v1285 = vpow.pop %v1284
        %v1286 = vmul.f32 %v1206, 1.442695
        %v1287 = vpow.pop %v1286
        %v1288 = vmul.f32 %v1207, 1.442695
        %v1289 = vpow.pop %v1288
        %v1290 = vmul.f32 %v1208, 1.442695
        %v1291 = vpow.pop %v1290
        %v1292 = vmul.f32 %v1209, 1.442695
        %v1293 = vpow.pop %v1292
        %v1294 = vmul.f32 %v1210, 1.442695
        %v1295 = vpow.pop %v1294
        %v1296 = vmul.f32 %v1211, 1.442695
        %v1297 = vpow.pop %v1296
        %v1298 = vmul.f32 %v1212, 1.442695
        %v1299 = vpow.pop %v1298
        %v1300 = vmul.f32 %v1213, 1.442695
        %v1301 = vpow.pop %v1300
        %v1302 = vmul.f32 %v1214, 1.442695
        %v1303 = vpow.pop %v1302
        %v1304 = vmul.f32 %v1215, 1.442695
        %v1305 = vpow.pop %v1304
        %v1306 = vmul.f32 %v1216, 1.442695
        %v1307 = vpow.pop %v1306
        %v1308 = vmul.f32 %v1217, 1.442695
        %v1309 = vpow.pop %v1308
        %v1310 = vmul.f32 %v1218, 1.442695
        %v1311 = vpow.pop %v1310
        %v1312 = vmul.f32 %v1219, 1.442695
        %v1313 = vpow.pop %v1312
        %v1314 = vmul.f32 %v1220, 1.442695
        %v1315 = vpow.pop %v1314
        %v1316 = vmul.f32 %v1221, 1.442695
        %v1317 = vpow.pop %v1316
        %v1318 = vadd.f32 %v1223, 1.0
        %v1319 = vadd.f32 %v1225, 1.0
        %v1320 = vadd.f32 %v1227, 1.0
        %v1321 = vadd.f32 %v1229, 1.0
        %v1322 = vadd.f32 %v1231, 1.0
        %v1323 = vadd.f32 %v1233, 1.0
        %v1324 = vadd.f32 %v1235, 1.0
        %v1325 = vadd.f32 %v1237, 1.0
        %v1326 = vadd.f32 %v1239, 1.0
        %v1327 = vadd.f32 %v1241, 1.0
        %v1328 = vadd.f32 %v1243, 1.0
        %v1329 = vadd.f32 %v1245, 1.0
        %v1330 = vadd.f32 %v1247, 1.0
        %v1331 = vadd.f32 %v1249, 1.0
        %v1332 = vadd.f32 %v1251, 1.0
        %v1333 = vadd.f32 %v1253, 1.0
        %v1334 = vadd.f32 %v1255, 1.0
        %v1335 = vadd.f32 %v1257, 1.0
        %v1336 = vadd.f32 %v1259, 1.0
        %v1337 = vadd.f32 %v1261, 1.0
        %v1338 = vadd.f32 %v1263, 1.0
        %v1339 = vadd.f32 %v1265, 1.0
        %v1340 = vadd.f32 %v1267, 1.0
        %v1341 = vadd.f32 %v1269, 1.0
        %v1342 = vadd.f32 %v1271, 1.0
        %v1343 = vadd.f32 %v1273, 1.0
        %v1344 = vadd.f32 %v1275, 1.0
        %v1345 = vadd.f32 %v1277, 1.0
        %v1346 = vadd.f32 %v1279, 1.0
        %v1347 = vadd.f32 %v1281, 1.0
        %v1348 = vadd.f32 %v1283, 1.0
        %v1349 = vadd.f32 %v1285, 1.0
        %v1350 = vadd.f32 %v1287, 1.0
        %v1351 = vadd.f32 %v1289, 1.0
        %v1352 = vadd.f32 %v1291, 1.0
        %v1353 = vadd.f32 %v1293, 1.0
        %v1354 = vadd.f32 %v1295, 1.0
        %v1355 = vadd.f32 %v1297, 1.0
        %v1356 = vadd.f32 %v1299, 1.0
        %v1357 = vadd.f32 %v1301, 1.0
        %v1358 = vadd.f32 %v1303, 1.0
        %v1359 = vadd.f32 %v1305, 1.0
        %v1360 = vadd.f32 %v1307, 1.0
        %v1361 = vadd.f32 %v1309, 1.0
        %v1362 = vadd.f32 %v1311, 1.0
        %v1363 = vadd.f32 %v1313, 1.0
        %v1364 = vadd.f32 %v1315, 1.0
        %v1365 = vadd.f32 %v1317, 1.0
        %v1366 = vrcp.pop %v1318
        %v1367 = vmul.f32 %v1318, %v1366
        %v1368 = vsub.f32 1.0, %v1367
        %v1369 = vmul.f32 %v1366, %v1368
        %v1370 = vadd.f32 %v1366, %v1369
        %vm1371 = vweird.f32 %v1318
        %vm1372 = vweird.f32 %v1366
        %vm1373 = vmor %vm1371, %vm1372
        %v1374 = vsel %vm1373, %v1366, %v1370
        %v1375 = vand.u32 2147483647, %v1318
        %vm1376 = vcmp.eq.f32.partialorder %v1375, 8.507059e+37
        %v1377 = vand.u32 %v1318, 2147483648
        %v1378 = vor.u32 1.1754944e-38, %v1377
        %v1379 = vsel %vm1376, %v1378, %v1374
        %v1380 = vmul.f32 1.0, %v1379
        %v1381 = vrcp.pop %v1319
        %v1382 = vmul.f32 %v1319, %v1381
        %v1383 = vsub.f32 1.0, %v1382
        %v1384 = vmul.f32 %v1381, %v1383
        %v1385 = vadd.f32 %v1381, %v1384
        %vm1386 = vweird.f32 %v1319
        %vm1387 = vweird.f32 %v1381
        %vm1388 = vmor %vm1386, %vm1387
        %v1389 = vsel %vm1388, %v1381, %v1385
        %v1390 = vand.u32 2147483647, %v1319
        %vm1391 = vcmp.eq.f32.partialorder %v1390, 8.507059e+37
        %v1392 = vand.u32 %v1319, 2147483648
        %v1393 = vor.u32 1.1754944e-38, %v1392
        %v1394 = vsel %vm1391, %v1393, %v1389
        %v1395 = vmul.f32 1.0, %v1394
        %v1396 = vrcp.pop %v1320
        %v1397 = vmul.f32 %v1320, %v1396
        %v1398 = vsub.f32 1.0, %v1397
        %v1399 = vmul.f32 %v1396, %v1398
        %v1400 = vadd.f32 %v1396, %v1399
        %vm1401 = vweird.f32 %v1320
        %vm1402 = vweird.f32 %v1396
        %vm1403 = vmor %vm1401, %vm1402
        %v1404 = vsel %vm1403, %v1396, %v1400
        %v1405 = vand.u32 2147483647, %v1320
        %vm1406 = vcmp.eq.f32.partialorder %v1405, 8.507059e+37
        %v1407 = vand.u32 %v1320, 2147483648
        %v1408 = vor.u32 1.1754944e-38, %v1407
        %v1409 = vsel %vm1406, %v1408, %v1404
        %v1410 = vmul.f32 1.0, %v1409
        %v1411 = vrcp.pop %v1321
        %v1412 = vmul.f32 %v1321, %v1411
        %v1413 = vsub.f32 1.0, %v1412
        %v1414 = vmul.f32 %v1411, %v1413
        %v1415 = vadd.f32 %v1411, %v1414
        %vm1416 = vweird.f32 %v1321
        %vm1417 = vweird.f32 %v1411
        %vm1418 = vmor %vm1416, %vm1417
        %v1419 = vsel %vm1418, %v1411, %v1415
        %v1420 = vand.u32 2147483647, %v1321
        %vm1421 = vcmp.eq.f32.partialorder %v1420, 8.507059e+37
        %v1422 = vand.u32 %v1321, 2147483648
        %v1423 = vor.u32 1.1754944e-38, %v1422
        %v1424 = vsel %vm1421, %v1423, %v1419
        %v1425 = vmul.f32 1.0, %v1424
        %v1426 = vrcp.pop %v1322
        %v1427 = vmul.f32 %v1322, %v1426
        %v1428 = vsub.f32 1.0, %v1427
        %v1429 = vmul.f32 %v1426, %v1428
        %v1430 = vadd.f32 %v1426, %v1429
        %vm1431 = vweird.f32 %v1322
        %vm1432 = vweird.f32 %v1426
        %vm1433 = vmor %vm1431, %vm1432
        %v1434 = vsel %vm1433, %v1426, %v1430
        %v1435 = vand.u32 2147483647, %v1322
        %vm1436 = vcmp.eq.f32.partialorder %v1435, 8.507059e+37
        %v1437 = vand.u32 %v1322, 2147483648
        %v1438 = vor.u32 1.1754944e-38, %v1437
        %v1439 = vsel %vm1436, %v1438, %v1434
        %v1440 = vmul.f32 1.0, %v1439
        %v1441 = vrcp.pop %v1323
        %v1442 = vmul.f32 %v1323, %v1441
        %v1443 = vsub.f32 1.0, %v1442
        %v1444 = vmul.f32 %v1441, %v1443
        %v1445 = vadd.f32 %v1441, %v1444
        %vm1446 = vweird.f32 %v1323
        %vm1447 = vweird.f32 %v1441
        %vm1448 = vmor %vm1446, %vm1447
        %v1449 = vsel %vm1448, %v1441, %v1445
        %v1450 = vand.u32 2147483647, %v1323
        %vm1451 = vcmp.eq.f32.partialorder %v1450, 8.507059e+37
        %v1452 = vand.u32 %v1323, 2147483648
        %v1453 = vor.u32 1.1754944e-38, %v1452
        %v1454 = vsel %vm1451, %v1453, %v1449
        %v1455 = vmul.f32 1.0, %v1454
        %v1456 = vrcp.pop %v1324
        %v1457 = vmul.f32 %v1324, %v1456
        %v1458 = vsub.f32 1.0, %v1457
        %v1459 = vmul.f32 %v1456, %v1458
        %v1460 = vadd.f32 %v1456, %v1459
        %vm1461 = vweird.f32 %v1324
        %vm1462 = vweird.f32 %v1456
        %vm1463 = vmor %vm1461, %vm1462
        %v1464 = vsel %vm1463, %v1456, %v1460
        %v1465 = vand.u32 2147483647, %v1324
        %vm1466 = vcmp.eq.f32.partialorder %v1465, 8.507059e+37
        %v1467 = vand.u32 %v1324, 2147483648
        %v1468 = vor.u32 1.1754944e-38, %v1467
        %v1469 = vsel %vm1466, %v1468, %v1464
        %v1470 = vmul.f32 1.0, %v1469
        %v1471 = vrcp.pop %v1325
        %v1472 = vmul.f32 %v1325, %v1471
        %v1473 = vsub.f32 1.0, %v1472
        %v1474 = vmul.f32 %v1471, %v1473
        %v1475 = vadd.f32 %v1471, %v1474
        %vm1476 = vweird.f32 %v1325
        %vm1477 = vweird.f32 %v1471
        %vm1478 = vmor %vm1476, %vm1477
        %v1479 = vsel %vm1478, %v1471, %v1475
        %v1480 = vand.u32 2147483647, %v1325
        %vm1481 = vcmp.eq.f32.partialorder %v1480, 8.507059e+37
        %v1482 = vand.u32 %v1325, 2147483648
        %v1483 = vor.u32 1.1754944e-38, %v1482
        %v1484 = vsel %vm1481, %v1483, %v1479
        %v1485 = vmul.f32 1.0, %v1484
        %v1486 = vrcp.pop %v1326
        %v1487 = vmul.f32 %v1326, %v1486
        %v1488 = vsub.f32 1.0, %v1487
        %v1489 = vmul.f32 %v1486, %v1488
        %v1490 = vadd.f32 %v1486, %v1489
        %vm1491 = vweird.f32 %v1326
        %vm1492 = vweird.f32 %v1486
        %vm1493 = vmor %vm1491, %vm1492
        %v1494 = vsel %vm1493, %v1486, %v1490
        %v1495 = vand.u32 2147483647, %v1326
        %vm1496 = vcmp.eq.f32.partialorder %v1495, 8.507059e+37
        %v1497 = vand.u32 %v1326, 2147483648
        %v1498 = vor.u32 1.1754944e-38, %v1497
        %v1499 = vsel %vm1496, %v1498, %v1494
        %v1500 = vmul.f32 1.0, %v1499
        %v1501 = vrcp.pop %v1327
        %v1502 = vmul.f32 %v1327, %v1501
        %v1503 = vsub.f32 1.0, %v1502
        %v1504 = vmul.f32 %v1501, %v1503
        %v1505 = vadd.f32 %v1501, %v1504
        %vm1506 = vweird.f32 %v1327
        %vm1507 = vweird.f32 %v1501
        %vm1508 = vmor %vm1506, %vm1507
        %v1509 = vsel %vm1508, %v1501, %v1505
        %v1510 = vand.u32 2147483647, %v1327
        %vm1511 = vcmp.eq.f32.partialorder %v1510, 8.507059e+37
        %v1512 = vand.u32 %v1327, 2147483648
        %v1513 = vor.u32 1.1754944e-38, %v1512
        %v1514 = vsel %vm1511, %v1513, %v1509
        %v1515 = vmul.f32 1.0, %v1514
        %v1516 = vrcp.pop %v1328
        %v1517 = vmul.f32 %v1328, %v1516
        %v1518 = vsub.f32 1.0, %v1517
        %v1519 = vmul.f32 %v1516, %v1518
        %v1520 = vadd.f32 %v1516, %v1519
        %vm1521 = vweird.f32 %v1328
        %vm1522 = vweird.f32 %v1516
        %vm1523 = vmor %vm1521, %vm1522
        %v1524 = vsel %vm1523, %v1516, %v1520
        %v1525 = vand.u32 2147483647, %v1328
        %vm1526 = vcmp.eq.f32.partialorder %v1525, 8.507059e+37
        %v1527 = vand.u32 %v1328, 2147483648
        %v1528 = vor.u32 1.1754944e-38, %v1527
        %v1529 = vsel %vm1526, %v1528, %v1524
        %v1530 = vmul.f32 1.0, %v1529
        %v1531 = vrcp.pop %v1329
        %v1532 = vmul.f32 %v1329, %v1531
        %v1533 = vsub.f32 1.0, %v1532
        %v1534 = vmul.f32 %v1531, %v1533
        %v1535 = vadd.f32 %v1531, %v1534
        %vm1536 = vweird.f32 %v1329
        %vm1537 = vweird.f32 %v1531
        %vm1538 = vmor %vm1536, %vm1537
        %v1539 = vsel %vm1538, %v1531, %v1535
        %v1540 = vand.u32 2147483647, %v1329
        %vm1541 = vcmp.eq.f32.partialorder %v1540, 8.507059e+37
        %v1542 = vand.u32 %v1329, 2147483648
        %v1543 = vor.u32 1.1754944e-38, %v1542
        %v1544 = vsel %vm1541, %v1543, %v1539
        %v1545 = vmul.f32 1.0, %v1544
        %v1546 = vrcp.pop %v1330
        %v1547 = vmul.f32 %v1330, %v1546
        %v1548 = vsub.f32 1.0, %v1547
        %v1549 = vmul.f32 %v1546, %v1548
        %v1550 = vadd.f32 %v1546, %v1549
        %vm1551 = vweird.f32 %v1330
        %vm1552 = vweird.f32 %v1546
        %vm1553 = vmor %vm1551, %vm1552
        %v1554 = vsel %vm1553, %v1546, %v1550
        %v1555 = vand.u32 2147483647, %v1330
        %vm1556 = vcmp.eq.f32.partialorder %v1555, 8.507059e+37
        %v1557 = vand.u32 %v1330, 2147483648
        %v1558 = vor.u32 1.1754944e-38, %v1557
        %v1559 = vsel %vm1556, %v1558, %v1554
        %v1560 = vmul.f32 1.0, %v1559
        %v1561 = vrcp.pop %v1331
        %v1562 = vmul.f32 %v1331, %v1561
        %v1563 = vsub.f32 1.0, %v1562
        %v1564 = vmul.f32 %v1561, %v1563
        %v1565 = vadd.f32 %v1561, %v1564
        %vm1566 = vweird.f32 %v1331
        %vm1567 = vweird.f32 %v1561
        %vm1568 = vmor %vm1566, %vm1567
        %v1569 = vsel %vm1568, %v1561, %v1565
        %v1570 = vand.u32 2147483647, %v1331
        %vm1571 = vcmp.eq.f32.partialorder %v1570, 8.507059e+37
        %v1572 = vand.u32 %v1331, 2147483648
        %v1573 = vor.u32 1.1754944e-38, %v1572
        %v1574 = vsel %vm1571, %v1573, %v1569
        %v1575 = vmul.f32 1.0, %v1574
        %v1576 = vrcp.pop %v1332
        %v1577 = vmul.f32 %v1332, %v1576
        %v1578 = vsub.f32 1.0, %v1577
        %v1579 = vmul.f32 %v1576, %v1578
        %v1580 = vadd.f32 %v1576, %v1579
        %vm1581 = vweird.f32 %v1332
        %vm1582 = vweird.f32 %v1576
        %vm1583 = vmor %vm1581, %vm1582
        %v1584 = vsel %vm1583, %v1576, %v1580
        %v1585 = vand.u32 2147483647, %v1332
        %vm1586 = vcmp.eq.f32.partialorder %v1585, 8.507059e+37
        %v1587 = vand.u32 %v1332, 2147483648
        %v1588 = vor.u32 1.1754944e-38, %v1587
        %v1589 = vsel %vm1586, %v1588, %v1584
        %v1590 = vmul.f32 1.0, %v1589
        %v1591 = vrcp.pop %v1333
        %v1592 = vmul.f32 %v1333, %v1591
        %v1593 = vsub.f32 1.0, %v1592
        %v1594 = vmul.f32 %v1591, %v1593
        %v1595 = vadd.f32 %v1591, %v1594
        %vm1596 = vweird.f32 %v1333
        %vm1597 = vweird.f32 %v1591
        %vm1598 = vmor %vm1596, %vm1597
        %v1599 = vsel %vm1598, %v1591, %v1595
        %v1600 = vand.u32 2147483647, %v1333
        %vm1601 = vcmp.eq.f32.partialorder %v1600, 8.507059e+37
        %v1602 = vand.u32 %v1333, 2147483648
        %v1603 = vor.u32 1.1754944e-38, %v1602
        %v1604 = vsel %vm1601, %v1603, %v1599
        %v1605 = vmul.f32 1.0, %v1604
        %v1606 = vrcp.pop %v1334
        %v1607 = vmul.f32 %v1334, %v1606
        %v1608 = vsub.f32 1.0, %v1607
        %v1609 = vmul.f32 %v1606, %v1608
        %v1610 = vadd.f32 %v1606, %v1609
        %vm1611 = vweird.f32 %v1334
        %vm1612 = vweird.f32 %v1606
        %vm1613 = vmor %vm1611, %vm1612
        %v1614 = vsel %vm1613, %v1606, %v1610
        %v1615 = vand.u32 2147483647, %v1334
        %vm1616 = vcmp.eq.f32.partialorder %v1615, 8.507059e+37
        %v1617 = vand.u32 %v1334, 2147483648
        %v1618 = vor.u32 1.1754944e-38, %v1617
        %v1619 = vsel %vm1616, %v1618, %v1614
        %v1620 = vmul.f32 1.0, %v1619
        %v1621 = vrcp.pop %v1335
        %v1622 = vmul.f32 %v1335, %v1621
        %v1623 = vsub.f32 1.0, %v1622
        %v1624 = vmul.f32 %v1621, %v1623
        %v1625 = vadd.f32 %v1621, %v1624
        %vm1626 = vweird.f32 %v1335
        %vm1627 = vweird.f32 %v1621
        %vm1628 = vmor %vm1626, %vm1627
        %v1629 = vsel %vm1628, %v1621, %v1625
        %v1630 = vand.u32 2147483647, %v1335
        %vm1631 = vcmp.eq.f32.partialorder %v1630, 8.507059e+37
        %v1632 = vand.u32 %v1335, 2147483648
        %v1633 = vor.u32 1.1754944e-38, %v1632
        %v1634 = vsel %vm1631, %v1633, %v1629
        %v1635 = vmul.f32 1.0, %v1634
        %v1636 = vrcp.pop %v1336
        %v1637 = vmul.f32 %v1336, %v1636
        %v1638 = vsub.f32 1.0, %v1637
        %v1639 = vmul.f32 %v1636, %v1638
        %v1640 = vadd.f32 %v1636, %v1639
        %vm1641 = vweird.f32 %v1336
        %vm1642 = vweird.f32 %v1636
        %vm1643 = vmor %vm1641, %vm1642
        %v1644 = vsel %vm1643, %v1636, %v1640
        %v1645 = vand.u32 2147483647, %v1336
        %vm1646 = vcmp.eq.f32.partialorder %v1645, 8.507059e+37
        %v1647 = vand.u32 %v1336, 2147483648
        %v1648 = vor.u32 1.1754944e-38, %v1647
        %v1649 = vsel %vm1646, %v1648, %v1644
        %v1650 = vmul.f32 1.0, %v1649
        %v1651 = vrcp.pop %v1337
        %v1652 = vmul.f32 %v1337, %v1651
        %v1653 = vsub.f32 1.0, %v1652
        %v1654 = vmul.f32 %v1651, %v1653
        %v1655 = vadd.f32 %v1651, %v1654
        %vm1656 = vweird.f32 %v1337
        %vm1657 = vweird.f32 %v1651
        %vm1658 = vmor %vm1656, %vm1657
        %v1659 = vsel %vm1658, %v1651, %v1655
        %v1660 = vand.u32 2147483647, %v1337
        %vm1661 = vcmp.eq.f32.partialorder %v1660, 8.507059e+37
        %v1662 = vand.u32 %v1337, 2147483648
        %v1663 = vor.u32 1.1754944e-38, %v1662
        %v1664 = vsel %vm1661, %v1663, %v1659
        %v1665 = vmul.f32 1.0, %v1664
        %v1666 = vrcp.pop %v1338
        %v1667 = vmul.f32 %v1338, %v1666
        %v1668 = vsub.f32 1.0, %v1667
        %v1669 = vmul.f32 %v1666, %v1668
        %v1670 = vadd.f32 %v1666, %v1669
        %vm1671 = vweird.f32 %v1338
        %vm1672 = vweird.f32 %v1666
        %vm1673 = vmor %vm1671, %vm1672
        %v1674 = vsel %vm1673, %v1666, %v1670
        %v1675 = vand.u32 2147483647, %v1338
        %vm1676 = vcmp.eq.f32.partialorder %v1675, 8.507059e+37
        %v1677 = vand.u32 %v1338, 2147483648
        %v1678 = vor.u32 1.1754944e-38, %v1677
        %v1679 = vsel %vm1676, %v1678, %v1674
        %v1680 = vmul.f32 1.0, %v1679
        %v1681 = vrcp.pop %v1339
        %v1682 = vmul.f32 %v1339, %v1681
        %v1683 = vsub.f32 1.0, %v1682
        %v1684 = vmul.f32 %v1681, %v1683
        %v1685 = vadd.f32 %v1681, %v1684
        %vm1686 = vweird.f32 %v1339
        %vm1687 = vweird.f32 %v1681
        %vm1688 = vmor %vm1686, %vm1687
        %v1689 = vsel %vm1688, %v1681, %v1685
        %v1690 = vand.u32 2147483647, %v1339
        %vm1691 = vcmp.eq.f32.partialorder %v1690, 8.507059e+37
        %v1692 = vand.u32 %v1339, 2147483648
        %v1693 = vor.u32 1.1754944e-38, %v1692
        %v1694 = vsel %vm1691, %v1693, %v1689
        %v1695 = vmul.f32 1.0, %v1694
        %v1696 = vrcp.pop %v1340
        %v1697 = vmul.f32 %v1340, %v1696
        %v1698 = vsub.f32 1.0, %v1697
        %v1699 = vmul.f32 %v1696, %v1698
        %v1700 = vadd.f32 %v1696, %v1699
        %vm1701 = vweird.f32 %v1340
        %vm1702 = vweird.f32 %v1696
        %vm1703 = vmor %vm1701, %vm1702
        %v1704 = vsel %vm1703, %v1696, %v1700
        %v1705 = vand.u32 2147483647, %v1340
        %vm1706 = vcmp.eq.f32.partialorder %v1705, 8.507059e+37
        %v1707 = vand.u32 %v1340, 2147483648
        %v1708 = vor.u32 1.1754944e-38, %v1707
        %v1709 = vsel %vm1706, %v1708, %v1704
        %v1710 = vmul.f32 1.0, %v1709
        %v1711 = vrcp.pop %v1341
        %v1712 = vmul.f32 %v1341, %v1711
        %v1713 = vsub.f32 1.0, %v1712
        %v1714 = vmul.f32 %v1711, %v1713
        %v1715 = vadd.f32 %v1711, %v1714
        %vm1716 = vweird.f32 %v1341
        %vm1717 = vweird.f32 %v1711
        %vm1718 = vmor %vm1716, %vm1717
        %v1719 = vsel %vm1718, %v1711, %v1715
        %v1720 = vand.u32 2147483647, %v1341
        %vm1721 = vcmp.eq.f32.partialorder %v1720, 8.507059e+37
        %v1722 = vand.u32 %v1341, 2147483648
        %v1723 = vor.u32 1.1754944e-38, %v1722
        %v1724 = vsel %vm1721, %v1723, %v1719
        %v1725 = vmul.f32 1.0, %v1724
        %v1726 = vrcp.pop %v1342
        %v1727 = vmul.f32 %v1342, %v1726
        %v1728 = vsub.f32 1.0, %v1727
        %v1729 = vmul.f32 %v1726, %v1728
        %v1730 = vadd.f32 %v1726, %v1729
        %vm1731 = vweird.f32 %v1342
        %vm1732 = vweird.f32 %v1726
        %vm1733 = vmor %vm1731, %vm1732
        %v1734 = vsel %vm1733, %v1726, %v1730
        %v1735 = vand.u32 2147483647, %v1342
        %vm1736 = vcmp.eq.f32.partialorder %v1735, 8.507059e+37
        %v1737 = vand.u32 %v1342, 2147483648
        %v1738 = vor.u32 1.1754944e-38, %v1737
        %v1739 = vsel %vm1736, %v1738, %v1734
        %v1740 = vmul.f32 1.0, %v1739
        %v1741 = vrcp.pop %v1343
        %v1742 = vmul.f32 %v1343, %v1741
        %v1743 = vsub.f32 1.0, %v1742
        %v1744 = vmul.f32 %v1741, %v1743
        %v1745 = vadd.f32 %v1741, %v1744
        %vm1746 = vweird.f32 %v1343
        %vm1747 = vweird.f32 %v1741
        %vm1748 = vmor %vm1746, %vm1747
        %v1749 = vsel %vm1748, %v1741, %v1745
        %v1750 = vand.u32 2147483647, %v1343
        %vm1751 = vcmp.eq.f32.partialorder %v1750, 8.507059e+37
        %v1752 = vand.u32 %v1343, 2147483648
        %v1753 = vor.u32 1.1754944e-38, %v1752
        %v1754 = vsel %vm1751, %v1753, %v1749
        %v1755 = vmul.f32 1.0, %v1754
        %v1756 = vrcp.pop %v1344
        %v1757 = vmul.f32 %v1344, %v1756
        %v1758 = vsub.f32 1.0, %v1757
        %v1759 = vmul.f32 %v1756, %v1758
        %v1760 = vadd.f32 %v1756, %v1759
        %vm1761 = vweird.f32 %v1344
        %vm1762 = vweird.f32 %v1756
        %vm1763 = vmor %vm1761, %vm1762
        %v1764 = vsel %vm1763, %v1756, %v1760
        %v1765 = vand.u32 2147483647, %v1344
        %vm1766 = vcmp.eq.f32.partialorder %v1765, 8.507059e+37
        %v1767 = vand.u32 %v1344, 2147483648
        %v1768 = vor.u32 1.1754944e-38, %v1767
        %v1769 = vsel %vm1766, %v1768, %v1764
        %v1770 = vmul.f32 1.0, %v1769
        %v1771 = vrcp.pop %v1345
        %v1772 = vmul.f32 %v1345, %v1771
        %v1773 = vsub.f32 1.0, %v1772
        %v1774 = vmul.f32 %v1771, %v1773
        %v1775 = vadd.f32 %v1771, %v1774
        %vm1776 = vweird.f32 %v1345
        %vm1777 = vweird.f32 %v1771
        %vm1778 = vmor %vm1776, %vm1777
        %v1779 = vsel %vm1778, %v1771, %v1775
        %v1780 = vand.u32 2147483647, %v1345
        %vm1781 = vcmp.eq.f32.partialorder %v1780, 8.507059e+37
        %v1782 = vand.u32 %v1345, 2147483648
        %v1783 = vor.u32 1.1754944e-38, %v1782
        %v1784 = vsel %vm1781, %v1783, %v1779
        %v1785 = vmul.f32 1.0, %v1784
        %v1786 = vrcp.pop %v1346
        %v1787 = vmul.f32 %v1346, %v1786
        %v1788 = vsub.f32 1.0, %v1787
        %v1789 = vmul.f32 %v1786, %v1788
        %v1790 = vadd.f32 %v1786, %v1789
        %vm1791 = vweird.f32 %v1346
        %vm1792 = vweird.f32 %v1786
        %vm1793 = vmor %vm1791, %vm1792
        %v1794 = vsel %vm1793, %v1786, %v1790
        %v1795 = vand.u32 2147483647, %v1346
        %vm1796 = vcmp.eq.f32.partialorder %v1795, 8.507059e+37
        %v1797 = vand.u32 %v1346, 2147483648
        %v1798 = vor.u32 1.1754944e-38, %v1797
        %v1799 = vsel %vm1796, %v1798, %v1794
        %v1800 = vmul.f32 1.0, %v1799
        %v1801 = vrcp.pop %v1347
        %v1802 = vmul.f32 %v1347, %v1801
        %v1803 = vsub.f32 1.0, %v1802
        %v1804 = vmul.f32 %v1801, %v1803
        %v1805 = vadd.f32 %v1801, %v1804
        %vm1806 = vweird.f32 %v1347
        %vm1807 = vweird.f32 %v1801
        %vm1808 = vmor %vm1806, %vm1807
        %v1809 = vsel %vm1808, %v1801, %v1805
        %v1810 = vand.u32 2147483647, %v1347
        %vm1811 = vcmp.eq.f32.partialorder %v1810, 8.507059e+37
        %v1812 = vand.u32 %v1347, 2147483648
        %v1813 = vor.u32 1.1754944e-38, %v1812
        %v1814 = vsel %vm1811, %v1813, %v1809
        %v1815 = vmul.f32 1.0, %v1814
        %v1816 = vrcp.pop %v1348
        %v1817 = vmul.f32 %v1348, %v1816
        %v1818 = vsub.f32 1.0, %v1817
        %v1819 = vmul.f32 %v1816, %v1818
        %v1820 = vadd.f32 %v1816, %v1819
        %vm1821 = vweird.f32 %v1348
        %vm1822 = vweird.f32 %v1816
        %vm1823 = vmor %vm1821, %vm1822
        %v1824 = vsel %vm1823, %v1816, %v1820
        %v1825 = vand.u32 2147483647, %v1348
        %vm1826 = vcmp.eq.f32.partialorder %v1825, 8.507059e+37
        %v1827 = vand.u32 %v1348, 2147483648
        %v1828 = vor.u32 1.1754944e-38, %v1827
        %v1829 = vsel %vm1826, %v1828, %v1824
        %v1830 = vmul.f32 1.0, %v1829
        %v1831 = vrcp.pop %v1349
        %v1832 = vmul.f32 %v1349, %v1831
        %v1833 = vsub.f32 1.0, %v1832
        %v1834 = vmul.f32 %v1831, %v1833
        %v1835 = vadd.f32 %v1831, %v1834
        %vm1836 = vweird.f32 %v1349
        %vm1837 = vweird.f32 %v1831
        %vm1838 = vmor %vm1836, %vm1837
        %v1839 = vsel %vm1838, %v1831, %v1835
        %v1840 = vand.u32 2147483647, %v1349
        %vm1841 = vcmp.eq.f32.partialorder %v1840, 8.507059e+37
        %v1842 = vand.u32 %v1349, 2147483648
        %v1843 = vor.u32 1.1754944e-38, %v1842
        %v1844 = vsel %vm1841, %v1843, %v1839
        %v1845 = vmul.f32 1.0, %v1844
        %v1846 = vrcp.pop %v1350
        %v1847 = vmul.f32 %v1350, %v1846
        %v1848 = vsub.f32 1.0, %v1847
        %v1849 = vmul.f32 %v1846, %v1848
        %v1850 = vadd.f32 %v1846, %v1849
        %vm1851 = vweird.f32 %v1350
        %vm1852 = vweird.f32 %v1846
        %vm1853 = vmor %vm1851, %vm1852
        %v1854 = vsel %vm1853, %v1846, %v1850
        %v1855 = vand.u32 2147483647, %v1350
        %vm1856 = vcmp.eq.f32.partialorder %v1855, 8.507059e+37
        %v1857 = vand.u32 %v1350, 2147483648
        %v1858 = vor.u32 1.1754944e-38, %v1857
        %v1859 = vsel %vm1856, %v1858, %v1854
        %v1860 = vmul.f32 1.0, %v1859
        %v1861 = vrcp.pop %v1351
        %v1862 = vmul.f32 %v1351, %v1861
        %v1863 = vsub.f32 1.0, %v1862
        %v1864 = vmul.f32 %v1861, %v1863
        %v1865 = vadd.f32 %v1861, %v1864
        %vm1866 = vweird.f32 %v1351
        %vm1867 = vweird.f32 %v1861
        %vm1868 = vmor %vm1866, %vm1867
        %v1869 = vsel %vm1868, %v1861, %v1865
        %v1870 = vand.u32 2147483647, %v1351
        %vm1871 = vcmp.eq.f32.partialorder %v1870, 8.507059e+37
        %v1872 = vand.u32 %v1351, 2147483648
        %v1873 = vor.u32 1.1754944e-38, %v1872
        %v1874 = vsel %vm1871, %v1873, %v1869
        %v1875 = vmul.f32 1.0, %v1874
        %v1876 = vrcp.pop %v1352
        %v1877 = vmul.f32 %v1352, %v1876
        %v1878 = vsub.f32 1.0, %v1877
        %v1879 = vmul.f32 %v1876, %v1878
        %v1880 = vadd.f32 %v1876, %v1879
        %vm1881 = vweird.f32 %v1352
        %vm1882 = vweird.f32 %v1876
        %vm1883 = vmor %vm1881, %vm1882
        %v1884 = vsel %vm1883, %v1876, %v1880
        %v1885 = vand.u32 2147483647, %v1352
        %vm1886 = vcmp.eq.f32.partialorder %v1885, 8.507059e+37
        %v1887 = vand.u32 %v1352, 2147483648
        %v1888 = vor.u32 1.1754944e-38, %v1887
        %v1889 = vsel %vm1886, %v1888, %v1884
        %v1890 = vmul.f32 1.0, %v1889
        %v1891 = vrcp.pop %v1353
        %v1892 = vmul.f32 %v1353, %v1891
        %v1893 = vsub.f32 1.0, %v1892
        %v1894 = vmul.f32 %v1891, %v1893
        %v1895 = vadd.f32 %v1891, %v1894
        %vm1896 = vweird.f32 %v1353
        %vm1897 = vweird.f32 %v1891
        %vm1898 = vmor %vm1896, %vm1897
        %v1899 = vsel %vm1898, %v1891, %v1895
        %v1900 = vand.u32 2147483647, %v1353
        %vm1901 = vcmp.eq.f32.partialorder %v1900, 8.507059e+37
        %v1902 = vand.u32 %v1353, 2147483648
        %v1903 = vor.u32 1.1754944e-38, %v1902
        %v1904 = vsel %vm1901, %v1903, %v1899
        %v1905 = vmul.f32 1.0, %v1904
        %v1906 = vrcp.pop %v1354
        %v1907 = vmul.f32 %v1354, %v1906
        %v1908 = vsub.f32 1.0, %v1907
        %v1909 = vmul.f32 %v1906, %v1908
        %v1910 = vadd.f32 %v1906, %v1909
        %vm1911 = vweird.f32 %v1354
        %vm1912 = vweird.f32 %v1906
        %vm1913 = vmor %vm1911, %vm1912
        %v1914 = vsel %vm1913, %v1906, %v1910
        %v1915 = vand.u32 2147483647, %v1354
        %vm1916 = vcmp.eq.f32.partialorder %v1915, 8.507059e+37
        %v1917 = vand.u32 %v1354, 2147483648
        %v1918 = vor.u32 1.1754944e-38, %v1917
        %v1919 = vsel %vm1916, %v1918, %v1914
        %v1920 = vmul.f32 1.0, %v1919
        %v1921 = vrcp.pop %v1355
        %v1922 = vmul.f32 %v1355, %v1921
        %v1923 = vsub.f32 1.0, %v1922
        %v1924 = vmul.f32 %v1921, %v1923
        %v1925 = vadd.f32 %v1921, %v1924
        %vm1926 = vweird.f32 %v1355
        %vm1927 = vweird.f32 %v1921
        %vm1928 = vmor %vm1926, %vm1927
        %v1929 = vsel %vm1928, %v1921, %v1925
        %v1930 = vand.u32 2147483647, %v1355
        %vm1931 = vcmp.eq.f32.partialorder %v1930, 8.507059e+37
        %v1932 = vand.u32 %v1355, 2147483648
        %v1933 = vor.u32 1.1754944e-38, %v1932
        %v1934 = vsel %vm1931, %v1933, %v1929
        %v1935 = vmul.f32 1.0, %v1934
        %v1936 = vrcp.pop %v1356
        %v1937 = vmul.f32 %v1356, %v1936
        %v1938 = vsub.f32 1.0, %v1937
        %v1939 = vmul.f32 %v1936, %v1938
        %v1940 = vadd.f32 %v1936, %v1939
        %vm1941 = vweird.f32 %v1356
        %vm1942 = vweird.f32 %v1936
        %vm1943 = vmor %vm1941, %vm1942
        %v1944 = vsel %vm1943, %v1936, %v1940
        %v1945 = vand.u32 2147483647, %v1356
        %vm1946 = vcmp.eq.f32.partialorder %v1945, 8.507059e+37
        %v1947 = vand.u32 %v1356, 2147483648
        %v1948 = vor.u32 1.1754944e-38, %v1947
        %v1949 = vsel %vm1946, %v1948, %v1944
        %v1950 = vmul.f32 1.0, %v1949
        %v1951 = vrcp.pop %v1357
        %v1952 = vmul.f32 %v1357, %v1951
        %v1953 = vsub.f32 1.0, %v1952
        %v1954 = vmul.f32 %v1951, %v1953
        %v1955 = vadd.f32 %v1951, %v1954
        %vm1956 = vweird.f32 %v1357
        %vm1957 = vweird.f32 %v1951
        %vm1958 = vmor %vm1956, %vm1957
        %v1959 = vsel %vm1958, %v1951, %v1955
        %v1960 = vand.u32 2147483647, %v1357
        %vm1961 = vcmp.eq.f32.partialorder %v1960, 8.507059e+37
        %v1962 = vand.u32 %v1357, 2147483648
        %v1963 = vor.u32 1.1754944e-38, %v1962
        %v1964 = vsel %vm1961, %v1963, %v1959
        %v1965 = vmul.f32 1.0, %v1964
        %v1966 = vrcp.pop %v1358
        %v1967 = vmul.f32 %v1358, %v1966
        %v1968 = vsub.f32 1.0, %v1967
        %v1969 = vmul.f32 %v1966, %v1968
        %v1970 = vadd.f32 %v1966, %v1969
        %vm1971 = vweird.f32 %v1358
        %vm1972 = vweird.f32 %v1966
        %vm1973 = vmor %vm1971, %vm1972
        %v1974 = vsel %vm1973, %v1966, %v1970
        %v1975 = vand.u32 2147483647, %v1358
        %vm1976 = vcmp.eq.f32.partialorder %v1975, 8.507059e+37
        %v1977 = vand.u32 %v1358, 2147483648
        %v1978 = vor.u32 1.1754944e-38, %v1977
        %v1979 = vsel %vm1976, %v1978, %v1974
        %v1980 = vmul.f32 1.0, %v1979
        %v1981 = vrcp.pop %v1359
        %v1982 = vmul.f32 %v1359, %v1981
        %v1983 = vsub.f32 1.0, %v1982
        %v1984 = vmul.f32 %v1981, %v1983
        %v1985 = vadd.f32 %v1981, %v1984
        %vm1986 = vweird.f32 %v1359
        %vm1987 = vweird.f32 %v1981
        %vm1988 = vmor %vm1986, %vm1987
        %v1989 = vsel %vm1988, %v1981, %v1985
        %v1990 = vand.u32 2147483647, %v1359
        %vm1991 = vcmp.eq.f32.partialorder %v1990, 8.507059e+37
        %v1992 = vand.u32 %v1359, 2147483648
        %v1993 = vor.u32 1.1754944e-38, %v1992
        %v1994 = vsel %vm1991, %v1993, %v1989
        %v1995 = vmul.f32 1.0, %v1994
        %v1996 = vrcp.pop %v1360
        %v1997 = vmul.f32 %v1360, %v1996
        %v1998 = vsub.f32 1.0, %v1997
        %v1999 = vmul.f32 %v1996, %v1998
        %v2000 = vadd.f32 %v1996, %v1999
        %vm2001 = vweird.f32 %v1360
        %vm2002 = vweird.f32 %v1996
        %vm2003 = vmor %vm2001, %vm2002
        %v2004 = vsel %vm2003, %v1996, %v2000
        %v2005 = vand.u32 2147483647, %v1360
        %vm2006 = vcmp.eq.f32.partialorder %v2005, 8.507059e+37
        %v2007 = vand.u32 %v1360, 2147483648
        %v2008 = vor.u32 1.1754944e-38, %v2007
        %v2009 = vsel %vm2006, %v2008, %v2004
        %v2010 = vmul.f32 1.0, %v2009
        %v2011 = vrcp.pop %v1361
        %v2012 = vmul.f32 %v1361, %v2011
        %v2013 = vsub.f32 1.0, %v2012
        %v2014 = vmul.f32 %v2011, %v2013
        %v2015 = vadd.f32 %v2011, %v2014
        %vm2016 = vweird.f32 %v1361
        %vm2017 = vweird.f32 %v2011
        %vm2018 = vmor %vm2016, %vm2017
        %v2019 = vsel %vm2018, %v2011, %v2015
        %v2020 = vand.u32 2147483647, %v1361
        %vm2021 = vcmp.eq.f32.partialorder %v2020, 8.507059e+37
        %v2022 = vand.u32 %v1361, 2147483648
        %v2023 = vor.u32 1.1754944e-38, %v2022
        %v2024 = vsel %vm2021, %v2023, %v2019
        %v2025 = vmul.f32 1.0, %v2024
        %v2026 = vrcp.pop %v1362
        %v2027 = vmul.f32 %v1362, %v2026
        %v2028 = vsub.f32 1.0, %v2027
        %v2029 = vmul.f32 %v2026, %v2028
        %v2030 = vadd.f32 %v2026, %v2029
        %vm2031 = vweird.f32 %v1362
        %vm2032 = vweird.f32 %v2026
        %vm2033 = vmor %vm2031, %vm2032
        %v2034 = vsel %vm2033, %v2026, %v2030
        %v2035 = vand.u32 2147483647, %v1362
        %vm2036 = vcmp.eq.f32.partialorder %v2035, 8.507059e+37
        %v2037 = vand.u32 %v1362, 2147483648
        %v2038 = vor.u32 1.1754944e-38, %v2037
        %v2039 = vsel %vm2036, %v2038, %v2034
        %v2040 = vmul.f32 1.0, %v2039
        %v2041 = vrcp.pop %v1363
        %v2042 = vmul.f32 %v1363, %v2041
        %v2043 = vsub.f32 1.0, %v2042
        %v2044 = vmul.f32 %v2041, %v2043
        %v2045 = vadd.f32 %v2041, %v2044
        %vm2046 = vweird.f32 %v1363
        %vm2047 = vweird.f32 %v2041
        %vm2048 = vmor %vm2046, %vm2047
        %v2049 = vsel %vm2048, %v2041, %v2045
        %v2050 = vand.u32 2147483647, %v1363
        %vm2051 = vcmp.eq.f32.partialorder %v2050, 8.507059e+37
        %v2052 = vand.u32 %v1363, 2147483648
        %v2053 = vor.u32 1.1754944e-38, %v2052
        %v2054 = vsel %vm2051, %v2053, %v2049
        %v2055 = vmul.f32 1.0, %v2054
        %v2056 = vrcp.pop %v1364
        %v2057 = vmul.f32 %v1364, %v2056
        %v2058 = vsub.f32 1.0, %v2057
        %v2059 = vmul.f32 %v2056, %v2058
        %v2060 = vadd.f32 %v2056, %v2059
        %vm2061 = vweird.f32 %v1364
        %vm2062 = vweird.f32 %v2056
        %vm2063 = vmor %vm2061, %vm2062
        %v2064 = vsel %vm2063, %v2056, %v2060
        %v2065 = vand.u32 2147483647, %v1364
        %vm2066 = vcmp.eq.f32.partialorder %v2065, 8.507059e+37
        %v2067 = vand.u32 %v1364, 2147483648
        %v2068 = vor.u32 1.1754944e-38, %v2067
        %v2069 = vsel %vm2066, %v2068, %v2064
        %v2070 = vmul.f32 1.0, %v2069
        %v2071 = vrcp.pop %v1365
        %v2072 = vmul.f32 %v1365, %v2071
        %v2073 = vsub.f32 1.0, %v2072
        %v2074 = vmul.f32 %v2071, %v2073
        %v2075 = vadd.f32 %v2071, %v2074
        %vm2076 = vweird.f32 %v1365
        %vm2077 = vweird.f32 %v2071
        %vm2078 = vmor %vm2076, %vm2077
        %v2079 = vsel %vm2078, %v2071, %v2075
        %v2080 = vand.u32 2147483647, %v1365
        %vm2081 = vcmp.eq.f32.partialorder %v2080, 8.507059e+37
        %v2082 = vand.u32 %v1365, 2147483648
        %v2083 = vor.u32 1.1754944e-38, %v2082
        %v2084 = vsel %vm2081, %v2083, %v2079
        %v2085 = vmul.f32 1.0, %v2084
        %vm2086 = vcmask 23552
        %2087 = vst.msk [vmem:[%s280] sm:$0xff] %vm2086, %v1380
        %2088 = vst.msk [vmem:[%s280 + $0x8] sm:$0xff] %vm2086, %v1395
        %2089 = vst.msk [vmem:[%s280 + $0x10] sm:$0xff] %vm2086, %v1410
        %2090 = vst.msk [vmem:[%s280 + $0x18] sm:$0xff] %vm2086, %v1425
        %2091 = vst.msk [vmem:[%s280 + $0x20] sm:$0xff] %vm2086, %v1440
        %2092 = vst.msk [vmem:[%s280 + $0x28] sm:$0xff] %vm2086, %v1455
        %2093 = vst.msk [vmem:[%s280 + $0x30] sm:$0xff] %vm2086, %v1470
        %2094 = vst.msk [vmem:[%s280 + $0x38] sm:$0xff] %vm2086, %v1485
        %2095 = vst.msk [vmem:[%s280 + $0x40] sm:$0xff] %vm2086, %v1500
        %2096 = vst.msk [vmem:[%s280 + $0x48] sm:$0xff] %vm2086, %v1515
        %2097 = vst.msk [vmem:[%s280 + $0x50] sm:$0xff] %vm2086, %v1530
        %2098 = vst.msk [vmem:[%s280 + $0x58] sm:$0xff] %vm2086, %v1545
        %2099 = vst.msk [vmem:[%s280 + $0x60] sm:$0xff] %vm2086, %v1560
        %2100 = vst.msk [vmem:[%s280 + $0x68] sm:$0xff] %vm2086, %v1575
        %2101 = vst.msk [vmem:[%s280 + $0x70] sm:$0xff] %vm2086, %v1590
        %2102 = vst.msk [vmem:[%s280 + $0x78] sm:$0xff] %vm2086, %v1605
        %2103 = vst.msk [vmem:[%s280 + $0x80] sm:$0xff] %vm2086, %v1620
        %2104 = vst.msk [vmem:[%s280 + $0x88] sm:$0xff] %vm2086, %v1635
        %2105 = vst.msk [vmem:[%s280 + $0x90] sm:$0xff] %vm2086, %v1650
        %2106 = vst.msk [vmem:[%s280 + $0x98] sm:$0xff] %vm2086, %v1665
        %2107 = vst.msk [vmem:[%s280 + $0xa0] sm:$0xff] %vm2086, %v1680
        %2108 = vst.msk [vmem:[%s280 + $0xa8] sm:$0xff] %vm2086, %v1695
        %2109 = vst.msk [vmem:[%s280 + $0xb0] sm:$0xff] %vm2086, %v1710
        %2110 = vst.msk [vmem:[%s280 + $0xb8] sm:$0xff] %vm2086, %v1725
        %2111 = vst.msk [vmem:[%s280 + $0xc0] sm:$0xff] %vm2086, %v1740
        %2112 = vst.msk [vmem:[%s280 + $0xc8] sm:$0xff] %vm2086, %v1755
        %2113 = vst.msk [vmem:[%s280 + $0xd0] sm:$0xff] %vm2086, %v1770
        %2114 = vst.msk [vmem:[%s280 + $0xd8] sm:$0xff] %vm2086, %v1785
        %2115 = vst.msk [vmem:[%s280 + $0xe0] sm:$0xff] %vm2086, %v1800
        %2116 = vst.msk [vmem:[%s280 + $0xe8] sm:$0xff] %vm2086, %v1815
        %2117 = vst.msk [vmem:[%s280 + $0xf0] sm:$0xff] %vm2086, %v1830
        %2118 = vst.msk [vmem:[%s280 + $0xf8] sm:$0xff] %vm2086, %v1845
        %2119 = vst.msk [vmem:[%s280 + $0x100] sm:$0xff] %vm2086, %v1860
        %2120 = vst.msk [vmem:[%s280 + $0x108] sm:$0xff] %vm2086, %v1875
        %2121 = vst.msk [vmem:[%s280 + $0x110] sm:$0xff] %vm2086, %v1890
        %2122 = vst.msk [vmem:[%s280 + $0x118] sm:$0xff] %vm2086, %v1905
        %2123 = vst.msk [vmem:[%s280 + $0x120] sm:$0xff] %vm2086, %v1920
        %2124 = vst.msk [vmem:[%s280 + $0x128] sm:$0xff] %vm2086, %v1935
        %2125 = vst.msk [vmem:[%s280 + $0x130] sm:$0xff] %vm2086, %v1950
        %2126 = vst.msk [vmem:[%s280 + $0x138] sm:$0xff] %vm2086, %v1965
        %2127 = vst.msk [vmem:[%s280 + $0x140] sm:$0xff] %vm2086, %v1980
        %2128 = vst.msk [vmem:[%s280 + $0x148] sm:$0xff] %vm2086, %v1995
        %2129 = vst.msk [vmem:[%s280 + $0x150] sm:$0xff] %vm2086, %v2010
        %2130 = vst.msk [vmem:[%s280 + $0x158] sm:$0xff] %vm2086, %v2025
        %2131 = vst.msk [vmem:[%s280 + $0x160] sm:$0xff] %vm2086, %v2040
        %2132 = vst.msk [vmem:[%s280 + $0x168] sm:$0xff] %vm2086, %v2055
        %2133 = vst.msk [vmem:[%s280 + $0x170] sm:$0xff] %vm2086, %v2070
        %2134 = vst.msk [vmem:[%s280 + $0x178] sm:$0xff] %vm2086, %v2085
        %s2135 = sand.u32 %s178, 1
        %s2136 = sand.u32 %s178, 1
        %s2137 = smul.addr %s2136, 384
        %s2138 = scalar_lea.vmem [#allocation2], %s2137
        // Predicated region
        $region49: #{tpu_custom_call.1} parent=47 // pred_check
          %p2139 = pneg %p188
        $region50: #{tpu_custom_call.1} parent=47 // pred_check_branch
          %2141 = sbr.rel (%p2139) target = $region52
        $region51: #{tpu_custom_call.1} parent=47 // pred_region
          %s2142 = smul.u32 48, %s18
          %s2143 = ssub.s32 125, %s2142
          %p2144 = scmp.lt.s32.totalorder %s2143, 48
          %s2145 = scalar_select %p2144, %s2143, 48
          %s2146 = smul.u32 8, %s2145
          %p2147 = scmp.ne.s32.totalorder 0, %s2146
          %s2148 = smul.addr %s2142, 8
          %s2149 = scalar_lea.vmem %s7, %s2148
          // Predicated region
          $region53: #{tpu_custom_call.1} parent=51 // pred_check
            %p2150 = pneg %p2147
          $region54: #{tpu_custom_call.1} parent=51 // pred_check_branch
            %2152 = sbr.rel (%p2150) target = $region56
          $region55: #{tpu_custom_call.1} parent=51 // pred_region
            // Predicated region
            $region57: #{tpu_custom_call.1} parent=55 // pred_check
              _
            $region58: #{tpu_custom_call.1} parent=55 // pred_check_branch
              %2154 = sbr.rel (0) target = $region60
            $region59: #{tpu_custom_call.1} parent=55 // pred_region
              // Predicated region
              $region79: #{tpu_custom_call.1} parent=59 // pred_check
                _
              $region80: #{tpu_custom_call.1} parent=59 // pred_check_branch
                %2266 = sbr.rel (0) target = $region82
              $region81: #{tpu_custom_call.1} parent=59 // pred_region
                %s2267 = sshrl.u32 %s2145, 5
                // While loop
                $region83: #{tpu_custom_call.1} parent=81 // loop_pre_header
                  _
                $region84: #{tpu_custom_call.1} parent=81 // loop_header
                  %s2269 = sphi 0, %s2271
                  %p2270 = scmp.ge.s32.totalorder %s2269, %s2267
                  %s2274 = sphi 0, %s2343
                  %s2275 = sphi %s2138, %s2346
                  %s2276 = sphi %s2149, %s2347
                $region85: #{tpu_custom_call.1} parent=81 // loop_header_branch
                  %2273 = sbr.rel (%p2270) target = $region89
                $region86: #{tpu_custom_call.1} parent=81 // loop_body
                  %v2277 = vld [vmem:[%s2275] sm:$0xff]
                  %2278 = vst [vmem:[%s2276] sm:$0xff] %v2277
                  %v2279 = vld [vmem:[%s2275 + $0x8] sm:$0xff]
                  %2280 = vst [vmem:[%s2276 + $0x8] sm:$0xff] %v2279
                  %v2281 = vld [vmem:[%s2275 + $0x10] sm:$0xff]
                  %2282 = vst [vmem:[%s2276 + $0x10] sm:$0xff] %v2281
                  %v2283 = vld [vmem:[%s2275 + $0x18] sm:$0xff]
                  %2284 = vst [vmem:[%s2276 + $0x18] sm:$0xff] %v2283
                  %v2285 = vld [vmem:[%s2275 + $0x20] sm:$0xff]
                  %2286 = vst [vmem:[%s2276 + $0x20] sm:$0xff] %v2285
                  %v2287 = vld [vmem:[%s2275 + $0x28] sm:$0xff]
                  %2288 = vst [vmem:[%s2276 + $0x28] sm:$0xff] %v2287
                  %v2289 = vld [vmem:[%s2275 + $0x30] sm:$0xff]
                  %2290 = vst [vmem:[%s2276 + $0x30] sm:$0xff] %v2289
                  %v2291 = vld [vmem:[%s2275 + $0x38] sm:$0xff]
                  %2292 = vst [vmem:[%s2276 + $0x38] sm:$0xff] %v2291
                  %v2293 = vld [vmem:[%s2275 + $0x40] sm:$0xff]
                  %2294 = vst [vmem:[%s2276 + $0x40] sm:$0xff] %v2293
                  %v2295 = vld [vmem:[%s2275 + $0x48] sm:$0xff]
                  %2296 = vst [vmem:[%s2276 + $0x48] sm:$0xff] %v2295
                  %v2297 = vld [vmem:[%s2275 + $0x50] sm:$0xff]
                  %2298 = vst [vmem:[%s2276 + $0x50] sm:$0xff] %v2297
                  %v2299 = vld [vmem:[%s2275 + $0x58] sm:$0xff]
                  %2300 = vst [vmem:[%s2276 + $0x58] sm:$0xff] %v2299
                  %v2301 = vld [vmem:[%s2275 + $0x60] sm:$0xff]
                  %2302 = vst [vmem:[%s2276 + $0x60] sm:$0xff] %v2301
                  %v2303 = vld [vmem:[%s2275 + $0x68] sm:$0xff]
                  %2304 = vst [vmem:[%s2276 + $0x68] sm:$0xff] %v2303
                  %v2305 = vld [vmem:[%s2275 + $0x70] sm:$0xff]
                  %2306 = vst [vmem:[%s2276 + $0x70] sm:$0xff] %v2305
                  %v2307 = vld [vmem:[%s2275 + $0x78] sm:$0xff]
                  %2308 = vst [vmem:[%s2276 + $0x78] sm:$0xff] %v2307
                  %v2309 = vld [vmem:[%s2275 + $0x80] sm:$0xff]
                  %2310 = vst [vmem:[%s2276 + $0x80] sm:$0xff] %v2309
                  %v2311 = vld [vmem:[%s2275 + $0x88] sm:$0xff]
                  %2312 = vst [vmem:[%s2276 + $0x88] sm:$0xff] %v2311
                  %v2313 = vld [vmem:[%s2275 + $0x90] sm:$0xff]
                  %2314 = vst [vmem:[%s2276 + $0x90] sm:$0xff] %v2313
                  %v2315 = vld [vmem:[%s2275 + $0x98] sm:$0xff]
                  %2316 = vst [vmem:[%s2276 + $0x98] sm:$0xff] %v2315
                  %v2317 = vld [vmem:[%s2275 + $0xa0] sm:$0xff]
                  %2318 = vst [vmem:[%s2276 + $0xa0] sm:$0xff] %v2317
                  %v2319 = vld [vmem:[%s2275 + $0xa8] sm:$0xff]
                  %2320 = vst [vmem:[%s2276 + $0xa8] sm:$0xff] %v2319
                  %v2321 = vld [vmem:[%s2275 + $0xb0] sm:$0xff]
                  %2322 = vst [vmem:[%s2276 + $0xb0] sm:$0xff] %v2321
                  %v2323 = vld [vmem:[%s2275 + $0xb8] sm:$0xff]
                  %2324 = vst [vmem:[%s2276 + $0xb8] sm:$0xff] %v2323
                  %v2325 = vld [vmem:[%s2275 + $0xc0] sm:$0xff]
                  %2326 = vst [vmem:[%s2276 + $0xc0] sm:$0xff] %v2325
                  %v2327 = vld [vmem:[%s2275 + $0xc8] sm:$0xff]
                  %2328 = vst [vmem:[%s2276 + $0xc8] sm:$0xff] %v2327
                  %v2329 = vld [vmem:[%s2275 + $0xd0] sm:$0xff]
                  %2330 = vst [vmem:[%s2276 + $0xd0] sm:$0xff] %v2329
                  %v2331 = vld [vmem:[%s2275 + $0xd8] sm:$0xff]
                  %2332 = vst [vmem:[%s2276 + $0xd8] sm:$0xff] %v2331
                  %v2333 = vld [vmem:[%s2275 + $0xe0] sm:$0xff]
                  %2334 = vst [vmem:[%s2276 + $0xe0] sm:$0xff] %v2333
                  %v2335 = vld [vmem:[%s2275 + $0xe8] sm:$0xff]
                  %2336 = vst [vmem:[%s2276 + $0xe8] sm:$0xff] %v2335
                  %v2337 = vld [vmem:[%s2275 + $0xf0] sm:$0xff]
                  %2338 = vst [vmem:[%s2276 + $0xf0] sm:$0xff] %v2337
                  %v2339 = vld [vmem:[%s2275 + $0xf8] sm:$0xff]
                  %2340 = vst [vmem:[%s2276 + $0xf8] sm:$0xff] %v2339
                  %s2341 = sadd.s32 1, %s2274
                  %p2342 = scmp.ge.s32.totalorder %s2341, %s2267
                  %s2343 = scalar_select %p2342, 0, %s2341
                  %s2344 = smul.u32 %s2343, 256
                  %s2345 = smul.u32 %s2343, 256
                  %s2346 = scalar_lea.vmem %s2138, %s2344 [#allocation2]
                  %s2347 = scalar_lea.vmem %s2149, %s2345
                $region87: #{tpu_custom_call.1} parent=81 // loop_footer
                  %s2271 = sadd.s32 %s2269, 1
                $region88: #{tpu_custom_call.1} parent=81 // loop_footer_branch
                  %2268 = sbr.rel target = $region84
                $region89: #{tpu_custom_call.1} parent=81 // loop_exit
                  _
                %s2348 = sshrl.u32 %s2145, 5
                %s2349 = sand.u32 %s2145, 31
                %s2350 = smul.u32 %s2348, 32
                %s2351 = smul.u32 8, %s2350
                %s2352 = scalar_lea.vmem %s2138, %s2351 [#allocation2]
                %s2353 = smul.u32 8, %s2350
                %s2354 = scalar_lea.vmem %s2149, %s2353
                // While loop
                $region90: #{tpu_custom_call.1} parent=81 // loop_pre_header
                  _
                $region91: #{tpu_custom_call.1} parent=81 // loop_header
                  %s2356 = sphi 0, %s2358
                  %p2357 = scmp.ge.s32.totalorder %s2356, %s2349
                  %s2361 = sphi 0, %s2368
                  %s2362 = sphi %s2352, %s2371
                  %s2363 = sphi %s2354, %s2372
                $region92: #{tpu_custom_call.1} parent=81 // loop_header_branch
                  %2360 = sbr.rel (%p2357) target = $region96
                $region93: #{tpu_custom_call.1} parent=81 // loop_body
                  %v2364 = vld [vmem:[%s2362] sm:$0xff]
                  %2365 = vst [vmem:[%s2363] sm:$0xff] %v2364
                  %s2366 = sadd.s32 1, %s2361
                  %p2367 = scmp.ge.s32.totalorder %s2366, %s2349
                  %s2368 = scalar_select %p2367, 0, %s2366
                  %s2369 = smul.u32 %s2368, 8
                  %s2370 = smul.u32 %s2368, 8
                  %s2371 = scalar_lea.vmem %s2352, %s2369 [#allocation2]
                  %s2372 = scalar_lea.vmem %s2354, %s2370
                $region94: #{tpu_custom_call.1} parent=81 // loop_footer
                  %s2358 = sadd.s32 %s2356, 1
                $region95: #{tpu_custom_call.1} parent=81 // loop_footer_branch
                  %2355 = sbr.rel target = $region91
                $region96: #{tpu_custom_call.1} parent=81 // loop_exit
                  _
              $region82: #{tpu_custom_call.1} parent=59 // pred_fallthru
                _
              // Predicated region
              $region97: #{tpu_custom_call.1} parent=59 // pred_check
                _
              $region98: #{tpu_custom_call.1} parent=59 // pred_check_branch
                %2374 = sbr.rel target = $region100
              $region99: #{tpu_custom_call.1} parent=59 // pred_region
                _
              $region100: #{tpu_custom_call.1} parent=59 // pred_fallthru
                _
            $region60: #{tpu_custom_call.1} parent=55 // pred_fallthru
              _
            // Predicated region
            $region61: #{tpu_custom_call.1} parent=55 // pred_check
              _
            $region62: #{tpu_custom_call.1} parent=55 // pred_check_branch
              %2156 = sbr.rel target = $region64
            $region63: #{tpu_custom_call.1} parent=55 // pred_region
              %s2158 = ssub.s32 256, 1
              %s2159 = sshrl.u32 %s2145, 5
              // While loop
              $region65: #{tpu_custom_call.1} parent=63 // loop_pre_header
                _
              $region66: #{tpu_custom_call.1} parent=63 // loop_header
                %s2161 = sphi 0, %s2163
                %p2162 = scmp.ge.s32.totalorder %s2161, %s2159
                %s2166 = sphi 0, %s2235
                %s2167 = sphi %s2138, %s2238
                %s2168 = sphi %s2149, %s2239
              $region67: #{tpu_custom_call.1} parent=63 // loop_header_branch
                %2165 = sbr.rel (%p2162) target = $region71
              $region68: #{tpu_custom_call.1} parent=63 // loop_body
                %v2169 = vld [vmem:[%s2167] sm:%s2158]
                %2170 = vst [vmem:[%s2168] sm:%s2158] %v2169
                %v2171 = vld [vmem:[%s2167 + $0x8] sm:%s2158]
                %2172 = vst [vmem:[%s2168 + $0x8] sm:%s2158] %v2171
                %v2173 = vld [vmem:[%s2167 + $0x10] sm:%s2158]
                %2174 = vst [vmem:[%s2168 + $0x10] sm:%s2158] %v2173
                %v2175 = vld [vmem:[%s2167 + $0x18] sm:%s2158]
                %2176 = vst [vmem:[%s2168 + $0x18] sm:%s2158] %v2175
                %v2177 = vld [vmem:[%s2167 + $0x20] sm:%s2158]
                %2178 = vst [vmem:[%s2168 + $0x20] sm:%s2158] %v2177
                %v2179 = vld [vmem:[%s2167 + $0x28] sm:%s2158]
                %2180 = vst [vmem:[%s2168 + $0x28] sm:%s2158] %v2179
                %v2181 = vld [vmem:[%s2167 + $0x30] sm:%s2158]
                %2182 = vst [vmem:[%s2168 + $0x30] sm:%s2158] %v2181
                %v2183 = vld [vmem:[%s2167 + $0x38] sm:%s2158]
                %2184 = vst [vmem:[%s2168 + $0x38] sm:%s2158] %v2183
                %v2185 = vld [vmem:[%s2167 + $0x40] sm:%s2158]
                %2186 = vst [vmem:[%s2168 + $0x40] sm:%s2158] %v2185
                %v2187 = vld [vmem:[%s2167 + $0x48] sm:%s2158]
                %2188 = vst [vmem:[%s2168 + $0x48] sm:%s2158] %v2187
                %v2189 = vld [vmem:[%s2167 + $0x50] sm:%s2158]
                %2190 = vst [vmem:[%s2168 + $0x50] sm:%s2158] %v2189
                %v2191 = vld [vmem:[%s2167 + $0x58] sm:%s2158]
                %2192 = vst [vmem:[%s2168 + $0x58] sm:%s2158] %v2191
                %v2193 = vld [vmem:[%s2167 + $0x60] sm:%s2158]
                %2194 = vst [vmem:[%s2168 + $0x60] sm:%s2158] %v2193
                %v2195 = vld [vmem:[%s2167 + $0x68] sm:%s2158]
                %2196 = vst [vmem:[%s2168 + $0x68] sm:%s2158] %v2195
                %v2197 = vld [vmem:[%s2167 + $0x70] sm:%s2158]
                %2198 = vst [vmem:[%s2168 + $0x70] sm:%s2158] %v2197
                %v2199 = vld [vmem:[%s2167 + $0x78] sm:%s2158]
                %2200 = vst [vmem:[%s2168 + $0x78] sm:%s2158] %v2199
                %v2201 = vld [vmem:[%s2167 + $0x80] sm:%s2158]
                %2202 = vst [vmem:[%s2168 + $0x80] sm:%s2158] %v2201
                %v2203 = vld [vmem:[%s2167 + $0x88] sm:%s2158]
                %2204 = vst [vmem:[%s2168 + $0x88] sm:%s2158] %v2203
                %v2205 = vld [vmem:[%s2167 + $0x90] sm:%s2158]
                %2206 = vst [vmem:[%s2168 + $0x90] sm:%s2158] %v2205
                %v2207 = vld [vmem:[%s2167 + $0x98] sm:%s2158]
                %2208 = vst [vmem:[%s2168 + $0x98] sm:%s2158] %v2207
                %v2209 = vld [vmem:[%s2167 + $0xa0] sm:%s2158]
                %2210 = vst [vmem:[%s2168 + $0xa0] sm:%s2158] %v2209
                %v2211 = vld [vmem:[%s2167 + $0xa8] sm:%s2158]
                %2212 = vst [vmem:[%s2168 + $0xa8] sm:%s2158] %v2211
                %v2213 = vld [vmem:[%s2167 + $0xb0] sm:%s2158]
                %2214 = vst [vmem:[%s2168 + $0xb0] sm:%s2158] %v2213
                %v2215 = vld [vmem:[%s2167 + $0xb8] sm:%s2158]
                %2216 = vst [vmem:[%s2168 + $0xb8] sm:%s2158] %v2215
                %v2217 = vld [vmem:[%s2167 + $0xc0] sm:%s2158]
                %2218 = vst [vmem:[%s2168 + $0xc0] sm:%s2158] %v2217
                %v2219 = vld [vmem:[%s2167 + $0xc8] sm:%s2158]
                %2220 = vst [vmem:[%s2168 + $0xc8] sm:%s2158] %v2219
                %v2221 = vld [vmem:[%s2167 + $0xd0] sm:%s2158]
                %2222 = vst [vmem:[%s2168 + $0xd0] sm:%s2158] %v2221
                %v2223 = vld [vmem:[%s2167 + $0xd8] sm:%s2158]
                %2224 = vst [vmem:[%s2168 + $0xd8] sm:%s2158] %v2223
                %v2225 = vld [vmem:[%s2167 + $0xe0] sm:%s2158]
                %2226 = vst [vmem:[%s2168 + $0xe0] sm:%s2158] %v2225
                %v2227 = vld [vmem:[%s2167 + $0xe8] sm:%s2158]
                %2228 = vst [vmem:[%s2168 + $0xe8] sm:%s2158] %v2227
                %v2229 = vld [vmem:[%s2167 + $0xf0] sm:%s2158]
                %2230 = vst [vmem:[%s2168 + $0xf0] sm:%s2158] %v2229
                %v2231 = vld [vmem:[%s2167 + $0xf8] sm:%s2158]
                %2232 = vst [vmem:[%s2168 + $0xf8] sm:%s2158] %v2231
                %s2233 = sadd.s32 1, %s2166
                %p2234 = scmp.ge.s32.totalorder %s2233, %s2159
                %s2235 = scalar_select %p2234, 0, %s2233
                %s2236 = smul.u32 %s2235, 256
                %s2237 = smul.u32 %s2235, 256
                %s2238 = scalar_lea.vmem %s2138, %s2236 [#allocation2]
                %s2239 = scalar_lea.vmem %s2149, %s2237
              $region69: #{tpu_custom_call.1} parent=63 // loop_footer
                %s2163 = sadd.s32 %s2161, 1
              $region70: #{tpu_custom_call.1} parent=63 // loop_footer_branch
                %2160 = sbr.rel target = $region66
              $region71: #{tpu_custom_call.1} parent=63 // loop_exit
                _
              %s2240 = sshrl.u32 %s2145, 5
              %s2241 = sand.u32 %s2145, 31
              %s2242 = smul.u32 %s2240, 32
              %s2243 = smul.u32 8, %s2242
              %s2244 = scalar_lea.vmem %s2138, %s2243 [#allocation2]
              %s2245 = smul.u32 8, %s2242
              %s2246 = scalar_lea.vmem %s2149, %s2245
              // While loop
              $region72: #{tpu_custom_call.1} parent=63 // loop_pre_header
                _
              $region73: #{tpu_custom_call.1} parent=63 // loop_header
                %s2248 = sphi 0, %s2250
                %p2249 = scmp.ge.s32.totalorder %s2248, %s2241
                %s2253 = sphi 0, %s2260
                %s2254 = sphi %s2244, %s2263
                %s2255 = sphi %s2246, %s2264
              $region74: #{tpu_custom_call.1} parent=63 // loop_header_branch
                %2252 = sbr.rel (%p2249) target = $region78
              $region75: #{tpu_custom_call.1} parent=63 // loop_body
                %v2256 = vld [vmem:[%s2254] sm:%s2158]
                %2257 = vst [vmem:[%s2255] sm:%s2158] %v2256
                %s2258 = sadd.s32 1, %s2253
                %p2259 = scmp.ge.s32.totalorder %s2258, %s2241
                %s2260 = scalar_select %p2259, 0, %s2258
                %s2261 = smul.u32 %s2260, 8
                %s2262 = smul.u32 %s2260, 8
                %s2263 = scalar_lea.vmem %s2244, %s2261 [#allocation2]
                %s2264 = scalar_lea.vmem %s2246, %s2262
              $region76: #{tpu_custom_call.1} parent=63 // loop_footer
                %s2250 = sadd.s32 %s2248, 1
              $region77: #{tpu_custom_call.1} parent=63 // loop_footer_branch
                %2247 = sbr.rel target = $region73
              $region78: #{tpu_custom_call.1} parent=63 // loop_exit
                _
            $region64: #{tpu_custom_call.1} parent=55 // pred_fallthru
              _
          $region56: #{tpu_custom_call.1} parent=51 // pred_fallthru
            _
          %2375 = vnop
        $region52: #{tpu_custom_call.1} parent=47 // pred_fallthru
          _
      $region48: #{tpu_custom_call.1} parent=5 // pred_fallthru
        _
      %p2376 = scmp.le.s32.totalorder 2, %s13
      // Predicated region
      $region101: #{tpu_custom_call.1} parent=5 // pred_check
        %p2377 = pneg %p2376
      $region102: #{tpu_custom_call.1} parent=5 // pred_check_branch
        %2379 = sbr.rel (%p2377) target = $region104
      $region103: #{tpu_custom_call.1} parent=5 // pred_region
        %s2380 = ssub.s32 %s13, 2
        // Predicated region
        $region105: #{tpu_custom_call.1} parent=103 // pred_check
          %p2381 = pneg %p194
        $region106: #{tpu_custom_call.1} parent=103 // pred_check_branch
          %2383 = sbr.rel (%p2381) target = $region108
        $region107: #{tpu_custom_call.1} parent=103 // pred_region
          %s2384 = sand.u32 %s179, 1
          %s2385 = sand.u32 %s179, 1
          %s2386 = smul.addr %s2385, 384
          %s2387 = scalar_lea.vmem [#allocation2], %s2386
        $region108: #{tpu_custom_call.1} parent=103 // pred_fallthru
          _
      $region104: #{tpu_custom_call.1} parent=5 // pred_fallthru
        _
    $region6: #{tpu_custom_call.1} parent=1 // loop_footer
      %s17 = sadd.s32 1, %s13
    $region7: #{tpu_custom_call.1} parent=1 // loop_footer_branch
      %12 = sbr.rel target = $region3
    $region8: #{tpu_custom_call.1} parent=1 // loop_exit
      _

</llo_original>
